<compile_context>
chip_gen: v7x
topology: tpu7x:2x2x1
jax: 0.10.0
libtpu: 0.0.40
codegen_flags: <defaults>
</compile_context>

<pallas_src>
import numpy as np
import jax
import jax.numpy as jnp
from jax import lax
from jax.experimental import pallas as pl
from jax.experimental.pallas import tpu as pltpu

BN_EPS = 1e-5


# ----------------------------- Pallas kernels --------------------------------

def _branch_fuse_kernel(awb_ref, x1h_ref, x2_ref, w11_ref, sb11_ref,
                        w12_ref, sb12_ref, o_ref):
    """Fused: width-half of bilinear resize + 1x1conv/BN/ReLU (branch 1),
    1x1conv/BN/ReLU (branch 2), and channel concat (via slice stores).

    awb : (H2, W2, W1)   per-row width-interpolation matrix (broadcast over rows)
    x1h : (1, H2, W1, C1) x1 already height-resized (small tensor)
    x2  : (1, P2, C2)     high-res input, flattened spatial
    w1x : (Cin, mid)      1x1 conv weights
    sb1x: (2, mid)        folded BN scale / bias
    o   : (1, P2, 2*mid)
    """
    H2, W2, W1 = awb_ref.shape
    C1 = x1h_ref.shape[-1]
    mid = w11_ref.shape[-1]

    # width half of the separable bilinear resize: batched (over output rows) matmul
    # (H2, W2, W1) x (H2, W1, C1) -> (H2, W2, C1)
    up = lax.dot_general(
        awb_ref[...], x1h_ref[0],
        dimension_numbers=(((2,), (1,)), ((0,), (0,))),
        preferred_element_type=jnp.float32)
    up = up.reshape(H2 * W2, C1)

    sb1 = sb11_ref[...]
    y1 = jnp.dot(up, w11_ref[...], preferred_element_type=jnp.float32)
    y1 = jnp.maximum(y1 * sb1[0:1, :] + sb1[1:2, :], 0.0)

    sb2 = sb12_ref[...]
    y2 = jnp.dot(x2_ref[0], w12_ref[...], preferred_element_type=jnp.float32)
    y2 = jnp.maximum(y2 * sb2[0:1, :] + sb2[1:2, :], 0.0)

    # fused concat: each branch goes straight into its channel slice of the output
    o_ref[0, :, 0:mid] = y1
    o_ref[0, :, mid:2 * mid] = y2


def _conv3_taps(xp_ref, w_ref):
    """Accumulate the 9 shifted-slice matmuls of a 3x3 SAME conv (no HBM im2col).

    xp_ref: (1, H+2, W+2, C) zero-padded input slab (one batch element, in VMEM)
    w_ref : (3, 3, C, O)     HWIO weights
    returns (H*W, O) f32 accumulator.
    """
    _, Hp, Wp, C = xp_ref.shape
    H, W = Hp - 2, Wp - 2
    acc = None
    for dy in range(3):
        for dx in range(3):
            sl = xp_ref[0, dy:dy + H, dx:dx + W, :]            # (H, W, C)
            t = jnp.dot(sl.reshape(H * W, C), w_ref[dy, dx],
                        preferred_element_type=jnp.float32)    # (H*W, O)
            acc = t if acc is None else acc + t
    return acc


def _conv3_bn_relu_kernel(xp_ref, w_ref, sb_ref, o_ref):
    acc = _conv3_taps(xp_ref, w_ref)
    sb = sb_ref[...]
    o_ref[0] = jnp.maximum(acc * sb[0:1, :] + sb[1:2, :], 0.0)


def _conv3_bn_res_relu_kernel(xp_ref, res_ref, w_ref, sb_ref, o_ref):
    # second conv of the conv_block, with residual add fused before the final ReLU
    acc = _conv3_taps(xp_ref, w_ref)
    sb = sb_ref[...]
    o_ref[0] = jnp.maximum(acc * sb[0:1, :] + sb[1:2, :] + res_ref[0], 0.0)


# ----------------------------- pallas_call wrappers ---------------------------

_COMPILER_PARAMS = pltpu.CompilerParams(
    dimension_semantics=("parallel",),
    vmem_limit_bytes=32 * 1024 * 1024,
)


def _run_branch_fuse(awb, x1h, x2f, w11, sb11, w12, sb12):
    N, H2, W1, C1 = x1h.shape
    W2 = awb.shape[1]
    P2, C2 = x2f.shape[1], x2f.shape[2]
    mid = w11.shape[1]
    out_ch = 2 * mid
    return pl.pallas_call(
        _branch_fuse_kernel,
        out_shape=jax.ShapeDtypeStruct((N, P2, out_ch), jnp.float32),
        grid=(N,),
        in_specs=[
            pl.BlockSpec((H2, W2, W1), lambda n: (0, 0, 0)),
            pl.BlockSpec((1, H2, W1, C1), lambda n: (n, 0, 0, 0)),
            pl.BlockSpec((1, P2, C2), lambda n: (n, 0, 0)),
            pl.BlockSpec((C1, mid), lambda n: (0, 0)),
            pl.BlockSpec((2, mid), lambda n: (0, 0)),
            pl.BlockSpec((C2, mid), lambda n: (0, 0)),
            pl.BlockSpec((2, mid), lambda n: (0, 0)),
        ],
        out_specs=pl.BlockSpec((1, P2, out_ch), lambda n: (n, 0, 0)),
        compiler_params=_COMPILER_PARAMS,
    )(awb, x1h, x2f, w11, sb11, w12, sb12)


def _run_conv3(xp, w, sb, residual=None):
    """3x3 SAME conv + folded BN (+ optional residual) + ReLU, one batch per step."""
    N, Hp, Wp, C = xp.shape
    H, W = Hp - 2, Wp - 2
    O = w.shape[-1]
    P = H * W
    if residual is None:
        return pl.pallas_call(
            _conv3_bn_relu_kernel,
            out_shape=jax.ShapeDtypeStruct((N, P, O), jnp.float32),
            grid=(N,),
            in_specs=[
                pl.BlockSpec((1, Hp, Wp, C), lambda n: (n, 0, 0, 0)),
                pl.BlockSpec((3, 3, C, O), lambda n: (0, 0, 0, 0)),
                pl.BlockSpec((2, O), lambda n: (0, 0)),
            ],
            out_specs=pl.BlockSpec((1, P, O), lambda n: (n, 0, 0)),
            compiler_params=_COMPILER_PARAMS,
        )(xp, w, sb)
    return pl.pallas_call(
        _conv3_bn_res_relu_kernel,
        out_shape=jax.ShapeDtypeStruct((N, P, O), jnp.float32),
        grid=(N,),
        in_specs=[
            pl.BlockSpec((1, Hp, Wp, C), lambda n: (n, 0, 0, 0)),
            pl.BlockSpec((1, P, O), lambda n: (n, 0, 0)),
            pl.BlockSpec((3, 3, C, O), lambda n: (0, 0, 0, 0)),
            pl.BlockSpec((2, O), lambda n: (0, 0)),
        ],
        out_specs=pl.BlockSpec((1, P, O), lambda n: (n, 0, 0)),
        compiler_params=_COMPILER_PARAMS,
    )(xp, residual, w, sb)


# ----------------------------- glue helpers -----------------------------------

def bilinear_matrix_align_corners(out_size, in_size):
    """1-D bilinear interpolation matrix with align_corners=True (PyTorch semantics)."""
    A = np.zeros((out_size, in_size), dtype=np.float32)
    if out_size == 1:
        pos = np.zeros((1,), dtype=np.float64)
    else:
        pos = np.arange(out_size, dtype=np.float64) * (in_size - 1) / (out_size - 1)
    i0 = np.clip(np.floor(pos).astype(np.int64), 0, in_size - 1)
    i1 = np.clip(i0 + 1, 0, in_size - 1)
    frac = pos - i0
    for r in range(out_size):
        A[r, i0[r]] += 1.0 - frac[r]
        A[r, i1[r]] += frac[r]
    return jnp.asarray(A)


def fold_bn(gamma, beta, mean, var, conv_bias=None):
    """Fold inference-mode BatchNorm (and optional conv bias) into scale/bias."""
    scale = gamma / jnp.sqrt(var + BN_EPS)
    cb = jnp.zeros_like(mean) if conv_bias is None else conv_bias
    bias = beta + (cb - mean) * scale
    return jnp.stack([scale, bias], axis=0).astype(jnp.float32)


def _pad_hw(x):
    """Zero-pad H and W by 1 (SAME padding for the 3x3 convs); pure layout glue."""
    return jnp.pad(x, ((0, 0), (1, 1), (1, 1), (0, 0)))


# ----------------------------- DecoderBlock forward ---------------------------

def decoder_block_forward(x1, x2, params):
    """x1: (N,H1,W1,in_ch1) NHWC, x2: (N,H2,W2,in_ch2) NHWC -> (N,H2,W2,out_ch)."""
    N, H1, W1, C1 = x1.shape
    _, H2, W2, C2 = x2.shape
    out_ch = params["wc1"].shape[-1]

    # separable bilinear (align_corners=True) resize, no O(P^2) matrices:
    #  - height half applied here to the tiny low-res x1 (cheap XLA matmul),
    #  - width half runs inside the fused branch kernel as a batched matmul.
    A_h = bilinear_matrix_align_corners(H2, H1)
    A_w = bilinear_matrix_align_corners(W2, W1)
    x1h = jnp.einsum("Hh,nhwc->nHwc", A_h, x1,
                     precision=lax.Precision.HIGHEST)          # (N, H2, W1, C1)
    awb = jnp.broadcast_to(A_w, (H2, W2, W1))                  # tiny (H2, W2, W1)

    # fused: branch-1 (resize width + 1x1 conv + BN + ReLU),
    #        branch-2 (1x1 conv + BN + ReLU), concat -> residual xcat
    xcat = _run_branch_fuse(awb, x1h, x2.reshape(N, H2 * W2, C2),
                            params["w11"], params["sb11"],
                            params["w12"], params["sb12"])     # (N, P2, out_ch)
    xcat_img = xcat.reshape(N, H2, W2, out_ch)

    # conv_block: conv3x3+BN+ReLU, conv3x3+BN, +residual, ReLU
    # (no HBM im2col: kernels accumulate 9 shifted-slice matmuls over padded slabs)
    h = _run_conv3(_pad_hw(xcat_img), params["wc1"], params["sbc1"])
    out = _run_conv3(_pad_hw(h.reshape(N, H2, W2, out_ch)),
                     params["wc2"], params["sbc2"], residual=xcat)
    return out.reshape(N, H2, W2, out_ch)


# ----------------------------- pure-JAX reference -----------------------------

def reference_forward(x1, x2, params):
    N, H1, W1, C1 = x1.shape
    _, H2, W2, C2 = x2.shape
    A_h = bilinear_matrix_align_corners(H2, H1)
    A_w = bilinear_matrix_align_corners(W2, W1)
    hp = lax.Precision.HIGHEST

    up = jnp.einsum("Hh,nhwc->nHwc", A_h, x1, precision=hp)
    up = jnp.einsum("Ww,nhwc->nhWc", A_w, up, precision=hp)
    y1 = jnp.maximum(jnp.einsum("nhwc,cd->nhwd", up, params["w11"], precision=hp)
                     * params["sb11"][0] + params["sb11"][1], 0.0)
    y2 = jnp.maximum(jnp.einsum("nhwc,cd->nhwd", x2, params["w12"], precision=hp)
                     * params["sb12"][0] + params["sb12"][1], 0.0)
    xcat = jnp.concatenate([y1, y2], axis=-1)

    def conv3(x, w, sb, res=None):
        y = lax.conv_general_dilated(
            x, w, (1, 1), "SAME",
            dimension_numbers=("NHWC", "HWIO", "NHWC"), precision=hp)
        y = y * sb[0] + sb[1]
        if res is not None:
            y = y + res
        return jnp.maximum(y, 0.0)

    h = conv3(xcat, params["wc1"], params["sbc1"])
    return conv3(h, params["wc2"], params["sbc2"], res=xcat)


# ----------------------------- parameter init ---------------------------------

def init_params(key, in_ch1, in_ch2, out_ch):
    mid = out_ch // 2
    ks = jax.random.split(key, 10)

    def bn(k, c):
        k1, k2, k3, k4 = jax.random.split(k, 4)
        gamma = 1.0 + 0.1 * jax.random.normal(k1, (c,), jnp.float32)
        beta = 0.1 * jax.random.normal(k2, (c,), jnp.float32)
        mean = 0.1 * jax.random.normal(k3, (c,), jnp.float32)
        var = 1.0 + 0.1 * jax.random.uniform(k4, (c,), jnp.float32)
        return gamma, beta, mean, var

    w11 = 0.1 * jax.random.normal(ks[0], (in_ch1, mid), jnp.float32)   # 1x1, no bias
    w12 = 0.1 * jax.random.normal(ks[1], (in_ch2, mid), jnp.float32)   # 1x1, no bias
    wc1 = 0.1 * jax.random.normal(ks[2], (3, 3, out_ch, out_ch), jnp.float32)  # HWIO
    bc1 = 0.1 * jax.random.normal(ks[3], (out_ch,), jnp.float32)
    wc2 = 0.1 * jax.random.normal(ks[4], (3, 3, out_ch, out_ch), jnp.float32)
    bc2 = 0.1 * jax.random.normal(ks[5], (out_ch,), jnp.float32)

    # BatchNorm applied in inference (running-stats) form, folded into scale/bias.
    sb11 = fold_bn(*bn(ks[6], mid))
    sb12 = fold_bn(*bn(ks[7], mid))
    sbc1 = fold_bn(*bn(ks[8], out_ch), conv_bias=bc1)
    sbc2 = fold_bn(*bn(ks[9], out_ch), conv_bias=bc2)

    return {
        "w11": w11, "w12": w12,
        "wc1": wc1, "wc2": wc2,
        "sb11": sb11, "sb12": sb12, "sbc1": sbc1, "sbc2": sbc2,
    }


# ----------------------------- main --------------------------------------------

if __name__ == "__main__":
    N, in_ch1, in_ch2, out_ch = 2, 4, 8, 16
    H1 = W1 = 8      # x1 (low-res feature)
    H2 = W2 = 16     # x2 (high-res feature, target size)

    key = jax.random.PRNGKey(0)
    kx1, kx2, kp = jax.random.split(key, 3)
    x1 = jax.random.normal(kx1, (N, H1, W1, in_ch1), jnp.float32)  # NHWC
    x2 = jax.random.normal(kx2, (N, H2, W2, in_ch2), jnp.float32)  # NHWC
    params = init_params(kp, in_ch1, in_ch2, out_ch)

    out = jax.block_until_ready(decoder_block_forward(x1, x2, params))
    ref = jax.block_until_ready(reference_forward(x1, x2, params))

    assert out.shape == (N, H2, W2, out_ch), out.shape
    if not jnp.allclose(out, ref, atol=2e-2, rtol=2e-2):
        raise AssertionError(
            f"mismatch vs reference: max abs err {jnp.max(jnp.abs(out - ref))}")

    print("KERNEL_OK")
</pallas_src>

<mosaic_0001>
module attributes {stable_mosaic.version = 11 : i64} {
  func.func @_branch_fuse_kernel(%arg0: i32, %arg1: memref<16x16x8xf32, #tpu.memory_space<vmem>>, %arg2: memref<1x16x8x4xf32, #tpu.memory_space<vmem>>, %arg3: memref<1x256x8xf32, #tpu.memory_space<vmem>>, %arg4: memref<4x8xf32, #tpu.memory_space<vmem>>, %arg5: memref<2x8xf32, #tpu.memory_space<vmem>>, %arg6: memref<8x8xf32, #tpu.memory_space<vmem>>, %arg7: memref<2x8xf32, #tpu.memory_space<vmem>>, %arg8: memref<1x256x16xf32, #tpu.memory_space<vmem>>) attributes {dimension_semantics = [#tpu.dimension_semantics<parallel>], iteration_bounds = array<i64: 2>, scalar_prefetch = 0 : i64, scratch_operands = 0 : i64, tpu.core_type = #tpu.core_type<tc>, window_params = [{pipeline_mode = #tpu.pipeline_mode<synchronous>, transform_indices = @transform_0, window_bounds = array<i64: 16, 16, 8>}, {transform_indices = @transform_1, window_bounds = array<i64: 1, 16, 8, 4>}, {transform_indices = @transform_2, window_bounds = array<i64: 1, 256, 8>}, {pipeline_mode = #tpu.pipeline_mode<synchronous>, transform_indices = @transform_3, window_bounds = array<i64: 4, 8>}, {pipeline_mode = #tpu.pipeline_mode<synchronous>, transform_indices = @transform_4, window_bounds = array<i64: 2, 8>}, {pipeline_mode = #tpu.pipeline_mode<synchronous>, transform_indices = @transform_5, window_bounds = array<i64: 8, 8>}, {pipeline_mode = #tpu.pipeline_mode<synchronous>, transform_indices = @transform_6, window_bounds = array<i64: 2, 8>}, {transform_indices = @transform_7, window_bounds = array<i64: 1, 256, 16>}]} {
    %c0 = arith.constant 0 : index
    %c0_0 = arith.constant 0 : index
    %c0_1 = arith.constant 0 : index
    %0 = vector.load %arg1[%c0, %c0_0, %c0_1] : memref<16x16x8xf32, #tpu.memory_space<vmem>>, vector<16x16x8xf32>
    %c0_2 = arith.constant 0 : index
    %c0_3 = arith.constant 0 : index
    %c0_4 = arith.constant 0 : index
    %c0_5 = arith.constant 0 : index
    %1 = vector.load %arg2[%c0_2, %c0_3, %c0_4, %c0_5] : memref<1x16x8x4xf32, #tpu.memory_space<vmem>>, vector<1x16x8x4xf32>
    %2 = vector.shape_cast %1 : vector<1x16x8x4xf32> to vector<16x8x4xf32>
    %cst = arith.constant dense<0.000000e+00> : vector<16x16x4xf32>
    %3 = tpu.matmul %0, %2, %cst {dimension_numbers = #tpu.dot_dimension_numbers<[2], [1], [1], [2], [0, 0, 0, 1, 1, 2], [0], [0]>} : vector<16x16x8xf32>, vector<16x8x4xf32>, vector<16x16x4xf32> -> vector<16x16x4xf32>
    %4 = vector.shape_cast %3 : vector<16x16x4xf32> to vector<256x4xf32>
    %c0_6 = arith.constant 0 : index
    %c0_7 = arith.constant 0 : index
    %5 = vector.load %arg5[%c0_6, %c0_7] : memref<2x8xf32, #tpu.memory_space<vmem>>, vector<2x8xf32>
    %c0_8 = arith.constant 0 : index
    %c0_9 = arith.constant 0 : index
    %6 = vector.load %arg4[%c0_8, %c0_9] : memref<4x8xf32, #tpu.memory_space<vmem>>, vector<4x8xf32>
    %cst_10 = arith.constant dense<0.000000e+00> : vector<256x8xf32>
    %7 = tpu.matmul %4, %6, %cst_10 {dimension_numbers = #tpu.dot_dimension_numbers<[1], [0], [0], [1], [0, 0, 1, 1], [], []>} : vector<256x4xf32>, vector<4x8xf32>, vector<256x8xf32> -> vector<256x8xf32>
    %8 = vector.extract_strided_slice %5 {offsets = [0, 0], sizes = [1, 8], strides = [1, 1]} : vector<2x8xf32> to vector<1x8xf32>
    %9 = vector.broadcast %8 : vector<1x8xf32> to vector<256x8xf32>
    %10 = arith.mulf %7, %9 : vector<256x8xf32>
    %11 = vector.extract_strided_slice %5 {offsets = [1, 0], sizes = [1, 8], strides = [1, 1]} : vector<2x8xf32> to vector<1x8xf32>
    %12 = vector.broadcast %11 : vector<1x8xf32> to vector<256x8xf32>
    %13 = arith.addf %10, %12 : vector<256x8xf32>
    %cst_11 = arith.constant 0.000000e+00 : f32
    %14 = vector.broadcast %cst_11 : f32 to vector<256x8xf32>
    %15 = arith.maximumf %13, %14 : vector<256x8xf32>
    %c0_12 = arith.constant 0 : index
    %c0_13 = arith.constant 0 : index
    %16 = vector.load %arg7[%c0_12, %c0_13] : memref<2x8xf32, #tpu.memory_space<vmem>>, vector<2x8xf32>
    %c0_14 = arith.constant 0 : index
    %c0_15 = arith.constant 0 : index
    %c0_16 = arith.constant 0 : index
    %17 = vector.load %arg3[%c0_14, %c0_15, %c0_16] : memref<1x256x8xf32, #tpu.memory_space<vmem>>, vector<1x256x8xf32>
    %18 = vector.shape_cast %17 : vector<1x256x8xf32> to vector<256x8xf32>
    %c0_17 = arith.constant 0 : index
    %c0_18 = arith.constant 0 : index
    %19 = vector.load %arg6[%c0_17, %c0_18] : memref<8x8xf32, #tpu.memory_space<vmem>>, vector<8x8xf32>
    %cst_19 = arith.constant dense<0.000000e+00> : vector<256x8xf32>
    %20 = tpu.matmul %18, %19, %cst_19 {dimension_numbers = #tpu.dot_dimension_numbers<[1], [0], [0], [1], [0, 0, 1, 1], [], []>} : vector<256x8xf32>, vector<8x8xf32>, vector<256x8xf32> -> vector<256x8xf32>
    %21 = vector.extract_strided_slice %16 {offsets = [0, 0], sizes = [1, 8], strides = [1, 1]} : vector<2x8xf32> to vector<1x8xf32>
    %22 = vector.broadcast %21 : vector<1x8xf32> to vector<256x8xf32>
    %23 = arith.mulf %20, %22 : vector<256x8xf32>
    %24 = vector.extract_strided_slice %16 {offsets = [1, 0], sizes = [1, 8], strides = [1, 1]} : vector<2x8xf32> to vector<1x8xf32>
    %25 = vector.broadcast %24 : vector<1x8xf32> to vector<256x8xf32>
    %26 = arith.addf %23, %25 : vector<256x8xf32>
    %cst_20 = arith.constant 0.000000e+00 : f32
    %27 = vector.broadcast %cst_20 : f32 to vector<256x8xf32>
    %28 = arith.maximumf %26, %27 : vector<256x8xf32>
    %c0_21 = arith.constant 0 : index
    %c0_22 = arith.constant 0 : index
    %c0_23 = arith.constant 0 : index
    %29 = vector.load %arg8[%c0_21, %c0_22, %c0_23] : memref<1x256x16xf32, #tpu.memory_space<vmem>>, vector<1x256x8xf32>
    %30 = vector.shape_cast %29 : vector<1x256x8xf32> to vector<256x8xf32>
    %31 = vector.shape_cast %15 : vector<256x8xf32> to vector<1x256x8xf32>
    tpu.vector_store %arg8[%c0_21, %c0_22, %c0_23], %31 {strides = array<i32>} : memref<1x256x16xf32, #tpu.memory_space<vmem>>, vector<1x256x8xf32>,
    %c0_24 = arith.constant 0 : index
    %c0_25 = arith.constant 0 : index
    %c8 = arith.constant 8 : index
    %32 = vector.load %arg8[%c0_24, %c0_25, %c8] : memref<1x256x16xf32, #tpu.memory_space<vmem>>, vector<1x256x8xf32>
    %33 = vector.shape_cast %32 : vector<1x256x8xf32> to vector<256x8xf32>
    %34 = vector.shape_cast %28 : vector<256x8xf32> to vector<1x256x8xf32>
    tpu.vector_store %arg8[%c0_24, %c0_25, %c8], %34 {strides = array<i32>} : memref<1x256x16xf32, #tpu.memory_space<vmem>>, vector<1x256x8xf32>,
    return
  }
  func.func @transform_0(%arg0: i32) -> (i32, i32, i32) {
    %c0_i32 = arith.constant 0 : i32
    %c0_i32_0 = arith.constant 0 : i32
    %c0_i32_1 = arith.constant 0 : i32
    %c0_i32_2 = arith.constant 0 : i32
    return %c0_i32, %c0_i32_0, %c0_i32_1 : i32, i32, i32
  }
  func.func @transform_1(%arg0: i32) -> (i32, i32, i32, i32) {
    %c0_i32 = arith.constant 0 : i32
    %c0_i32_0 = arith.constant 0 : i32
    %c0_i32_1 = arith.constant 0 : i32
    %c0_i32_2 = arith.constant 0 : i32
    return %arg0, %c0_i32, %c0_i32_0, %c0_i32_1 : i32, i32, i32, i32
  }
  func.func @transform_2(%arg0: i32) -> (i32, i32, i32) {
    %c0_i32 = arith.constant 0 : i32
    %c0_i32_0 = arith.constant 0 : i32
    %c0_i32_1 = arith.constant 0 : i32
    return %arg0, %c0_i32, %c0_i32_0 : i32, i32, i32
  }
  func.func @transform_3(%arg0: i32) -> (i32, i32) {
    %c0_i32 = arith.constant 0 : i32
    %c0_i32_0 = arith.constant 0 : i32
    %c0_i32_1 = arith.constant 0 : i32
    return %c0_i32, %c0_i32_0 : i32, i32
  }
  func.func @transform_4(%arg0: i32) -> (i32, i32) {
    %c0_i32 = arith.constant 0 : i32
    %c0_i32_0 = arith.constant 0 : i32
    %c0_i32_1 = arith.constant 0 : i32
    return %c0_i32, %c0_i32_0 : i32, i32
  }
  func.func @transform_5(%arg0: i32) -> (i32, i32) {
    %c0_i32 = arith.constant 0 : i32
    %c0_i32_0 = arith.constant 0 : i32
    %c0_i32_1 = arith.constant 0 : i32
    return %c0_i32, %c0_i32_0 : i32, i32
  }
  func.func @transform_6(%arg0: i32) -> (i32, i32) {
    %c0_i32 = arith.constant 0 : i32
    %c0_i32_0 = arith.constant 0 : i32
    %c0_i32_1 = arith.constant 0 : i32
    return %c0_i32, %c0_i32_0 : i32, i32
  }
  func.func @transform_7(%arg0: i32) -> (i32, i32, i32) {
    %c0_i32 = arith.constant 0 : i32
    %c0_i32_0 = arith.constant 0 : i32
    %c0_i32_1 = arith.constant 0 : i32
    return %arg0, %c0_i32, %c0_i32_0 : i32, i32, i32
  }
}

</mosaic_0001>

<llo_original>
// kernel: tpu_custom_call.1
$region0: #{tpu_custom_call.1}
  #allocation0 [shape = 'u32[]', space=smem, size = 0x4, offset = 0x4, fixed_abs, tag = 'smem constant byte address 0x4 - core index']
  #allocation1 [shape = 'u32[144,128]{1,0:T(1,128)}', space=vmem, size = 0x12000, scoped, tag = 'internal scratch']
  %s0 = inlined_call_operand.vmem [shape: f32[16,16,8], index: 0, kind: input, shape index: {}]
  %s1 = inlined_call_operand.vmem [shape: f32[2,16,8,4], index: 1, kind: input, shape index: {}]
  %s2 = inlined_call_operand.vmem [shape: f32[2,256,8], index: 2, kind: input, shape index: {}]
  %s3 = inlined_call_operand.vmem [shape: f32[4,8], index: 3, kind: input, shape index: {}]
  %s4 = inlined_call_operand.vmem [shape: f32[2,8], index: 4, kind: input, shape index: {}]
  %s5 = inlined_call_operand.vmem [shape: f32[8,8], index: 5, kind: input, shape index: {}]
  %s6 = inlined_call_operand.vmem [shape: f32[2,8], index: 6, kind: input, shape index: {}]
  %s7 = inlined_call_operand.vmem [shape: f32[2,256,16], index: 7, kind: output, shape index: {}]
  %s8 = sld [smem:[#allocation0]]
  $region61: #{tpu_custom_call.1} parent=0
    _
  %s10 = ssub.s32 1, %s8
  %s11 = scalar_select 0, %s10, %s8
  loop: start=0, step=1, limit=4
  $region2: #{tpu_custom_call.1} parent=0 // loop_pre_header
    _
  $region3: #{tpu_custom_call.1} parent=0 // loop_header
    %s13 = sphi 0, %s17
    %p14 = scmp.ge.s32.totalorder %s13, 4
    %s21 = sphi 0, %s21
    %s23 = sphi 0, %s21
    %s24 = sphi 0, %s23
    %s38 = sphi 0, %s24
    %s44 = sphi 0, %s46
    %s47 = sphi 0, %s44
    %s48 = sphi 0, %s47
    %s64 = sphi 0, %s48
    %s70 = sphi 0, %s72
    %s73 = sphi 0, %s70
    %s74 = sphi 0, %s73
    %s90 = sphi 0, %s74
    %s94 = sphi 0, %s94
    %s96 = sphi 0, %s94
    %s97 = sphi 0, %s96
    %s111 = sphi 0, %s97
    %s115 = sphi 0, %s115
    %s117 = sphi 0, %s115
    %s118 = sphi 0, %s117
    %s132 = sphi 0, %s118
    %s136 = sphi 0, %s136
    %s138 = sphi 0, %s136
    %s139 = sphi 0, %s138
    %s153 = sphi 0, %s139
    %s157 = sphi 0, %s157
    %s159 = sphi 0, %s157
    %s160 = sphi 0, %s159
    %s174 = sphi 0, %s160
    %s180 = sphi 0, %s182
    %s183 = sphi 0, %s180
    %s184 = sphi 0, %s183
    %s200 = sphi 0, %s184
  $region4: #{tpu_custom_call.1} parent=0 // loop_header_branch
    %16 = sbr.rel (%p14) target = $region8
  $region5: #{tpu_custom_call.1} parent=0 // loop_body
    %s18 = ssub.s32 %s13, 1
    %s19 = ssub.s32 %s13, 2
    %s20 = sadd.s32 %s13, 1
    %s22 = sadd.s32 %s21, 1
    %p25 = scmp.eq.s32.totalorder %s13, 1
    %p26 = scmp.ne.s32.totalorder %s21, %s23
    %p27 = scmp.eq.s32.totalorder %s13, 0
    %p28 = por %p26, %p27
    %p29 = scmp.ne.s32.totalorder %s21, %s23
    %p30 = scmp.eq.s32.totalorder %s18, 1
    %p31 = por %p29, %p30
    %p32 = scmp.ne.s32.totalorder %s23, %s24
    %p33 = scmp.eq.s32.totalorder %s18, 0
    %p34 = por %p32, %p33
    %p35 = scmp.ne.s32.totalorder %s23, %s24
    %p36 = scmp.eq.s32.totalorder %s19, 1
    %p37 = por %p35, %p36
    %p39 = scmp.ne.s32.totalorder %s24, %s38
    %p40 = scmp.eq.s32.totalorder %s19, 0
    %p41 = por %p39, %p40
    %s42 = ssub.s32 %s13, %s20
    %p43 = scmp.eq.s32.totalorder %s42, 0
    %s45 = sadd.s32 %s44, 1
    %s46 = scalar_select %p43, %s44, %s45
    %p49 = pneg %p43
    %p50 = scmp.eq.s32.totalorder %s13, 1
    %p51 = por %p49, %p50
    %p52 = scmp.ne.s32.totalorder %s44, %s47
    %p53 = scmp.eq.s32.totalorder %s13, 0
    %p54 = por %p52, %p53
    %p55 = scmp.ne.s32.totalorder %s44, %s47
    %p56 = scmp.eq.s32.totalorder %s18, 1
    %p57 = por %p55, %p56
    %p58 = scmp.ne.s32.totalorder %s47, %s48
    %p59 = scmp.eq.s32.totalorder %s18, 0
    %p60 = por %p58, %p59
    %p61 = scmp.ne.s32.totalorder %s47, %s48
    %p62 = scmp.eq.s32.totalorder %s19, 1
    %p63 = por %p61, %p62
    %p65 = scmp.ne.s32.totalorder %s48, %s64
    %p66 = scmp.eq.s32.totalorder %s19, 0
    %p67 = por %p65, %p66
    %s68 = ssub.s32 %s13, %s20
    %p69 = scmp.eq.s32.totalorder %s68, 0
    %s71 = sadd.s32 %s70, 1
    %s72 = scalar_select %p69, %s70, %s71
    %p75 = pneg %p69
    %p76 = scmp.eq.s32.totalorder %s13, 1
    %p77 = por %p75, %p76
    %p78 = scmp.ne.s32.totalorder %s70, %s73
    %p79 = scmp.eq.s32.totalorder %s13, 0
    %p80 = por %p78, %p79
    %p81 = scmp.ne.s32.totalorder %s70, %s73
    %p82 = scmp.eq.s32.totalorder %s18, 1
    %p83 = por %p81, %p82
    %p84 = scmp.ne.s32.totalorder %s73, %s74
    %p85 = scmp.eq.s32.totalorder %s18, 0
    %p86 = por %p84, %p85
    %p87 = scmp.ne.s32.totalorder %s73, %s74
    %p88 = scmp.eq.s32.totalorder %s19, 1
    %p89 = por %p87, %p88
    %p91 = scmp.ne.s32.totalorder %s74, %s90
    %p92 = scmp.eq.s32.totalorder %s19, 0
    %p93 = por %p91, %p92
    %s95 = sadd.s32 %s94, 1
    %p98 = scmp.eq.s32.totalorder %s13, 1
    %p99 = scmp.ne.s32.totalorder %s94, %s96
    %p100 = scmp.eq.s32.totalorder %s13, 0
    %p101 = por %p99, %p100
    %p102 = scmp.ne.s32.totalorder %s94, %s96
    %p103 = scmp.eq.s32.totalorder %s18, 1
    %p104 = por %p102, %p103
    %p105 = scmp.ne.s32.totalorder %s96, %s97
    %p106 = scmp.eq.s32.totalorder %s18, 0
    %p107 = por %p105, %p106
    %p108 = scmp.ne.s32.totalorder %s96, %s97
    %p109 = scmp.eq.s32.totalorder %s19, 1
    %p110 = por %p108, %p109
    %p112 = scmp.ne.s32.totalorder %s97, %s111
    %p113 = scmp.eq.s32.totalorder %s19, 0
    %p114 = por %p112, %p113
    %s116 = sadd.s32 %s115, 1
    %p119 = scmp.eq.s32.totalorder %s13, 1
    %p120 = scmp.ne.s32.totalorder %s115, %s117
    %p121 = scmp.eq.s32.totalorder %s13, 0
    %p122 = por %p120, %p121
    %p123 = scmp.ne.s32.totalorder %s115, %s117
    %p124 = scmp.eq.s32.totalorder %s18, 1
    %p125 = por %p123, %p124
    %p126 = scmp.ne.s32.totalorder %s117, %s118
    %p127 = scmp.eq.s32.totalorder %s18, 0
    %p128 = por %p126, %p127
    %p129 = scmp.ne.s32.totalorder %s117, %s118
    %p130 = scmp.eq.s32.totalorder %s19, 1
    %p131 = por %p129, %p130
    %p133 = scmp.ne.s32.totalorder %s118, %s132
    %p134 = scmp.eq.s32.totalorder %s19, 0
    %p135 = por %p133, %p134
    %s137 = sadd.s32 %s136, 1
    %p140 = scmp.eq.s32.totalorder %s13, 1
    %p141 = scmp.ne.s32.totalorder %s136, %s138
    %p142 = scmp.eq.s32.totalorder %s13, 0
    %p143 = por %p141, %p142
    %p144 = scmp.ne.s32.totalorder %s136, %s138
    %p145 = scmp.eq.s32.totalorder %s18, 1
    %p146 = por %p144, %p145
    %p147 = scmp.ne.s32.totalorder %s138, %s139
    %p148 = scmp.eq.s32.totalorder %s18, 0
    %p149 = por %p147, %p148
    %p150 = scmp.ne.s32.totalorder %s138, %s139
    %p151 = scmp.eq.s32.totalorder %s19, 1
    %p152 = por %p150, %p151
    %p154 = scmp.ne.s32.totalorder %s139, %s153
    %p155 = scmp.eq.s32.totalorder %s19, 0
    %p156 = por %p154, %p155
    %s158 = sadd.s32 %s157, 1
    %p161 = scmp.eq.s32.totalorder %s13, 1
    %p162 = scmp.ne.s32.totalorder %s157, %s159
    %p163 = scmp.eq.s32.totalorder %s13, 0
    %p164 = por %p162, %p163
    %p165 = scmp.ne.s32.totalorder %s157, %s159
    %p166 = scmp.eq.s32.totalorder %s18, 1
    %p167 = por %p165, %p166
    %p168 = scmp.ne.s32.totalorder %s159, %s160
    %p169 = scmp.eq.s32.totalorder %s18, 0
    %p170 = por %p168, %p169
    %p171 = scmp.ne.s32.totalorder %s159, %s160
    %p172 = scmp.eq.s32.totalorder %s19, 1
    %p173 = por %p171, %p172
    %p175 = scmp.ne.s32.totalorder %s160, %s174
    %p176 = scmp.eq.s32.totalorder %s19, 0
    %p177 = por %p175, %p176
    %s178 = ssub.s32 %s13, %s20
    %p179 = scmp.eq.s32.totalorder %s178, 0
    %s181 = sadd.s32 %s180, 1
    %s182 = scalar_select %p179, %s180, %s181
    %p185 = pneg %p179
    %p186 = scmp.eq.s32.totalorder %s13, 1
    %p187 = por %p185, %p186
    %p188 = scmp.ne.s32.totalorder %s180, %s183
    %p189 = scmp.eq.s32.totalorder %s13, 0
    %p190 = por %p188, %p189
    %p191 = scmp.ne.s32.totalorder %s180, %s183
    %p192 = scmp.eq.s32.totalorder %s18, 1
    %p193 = por %p191, %p192
    %p194 = scmp.ne.s32.totalorder %s183, %s184
    %p195 = scmp.eq.s32.totalorder %s18, 0
    %p196 = por %p194, %p195
    %p197 = scmp.ne.s32.totalorder %s183, %s184
    %p198 = scmp.eq.s32.totalorder %s19, 1
    %p199 = por %p197, %p198
    %p201 = scmp.ne.s32.totalorder %s184, %s200
    %p202 = scmp.eq.s32.totalorder %s19, 0
    %p203 = por %p201, %p202
    %p204 = scmp.le.s32.totalorder 1, %s13
    %p205 = scmp.lt.s32.totalorder %s13, 3
    %p206 = pnand %p204, %p205
    %p207 = pneg %p206
    // Predicated region
    $region9: #{tpu_custom_call.1} parent=5 // pred_check
      _
    $region10: #{tpu_custom_call.1} parent=5 // pred_check_branch
      %209 = sbr.rel (%p206) target = $region12
    $region11: #{tpu_custom_call.1} parent=5 // pred_region
      %s210 = ssub.s32 %s13, 1
      // Predicated region
      $region13: #{tpu_custom_call.1} parent=11 // pred_check
        %p211 = pneg %p34
      $region14: #{tpu_custom_call.1} parent=11 // pred_check_branch
        %213 = sbr.rel (%p211) target = $region16
      $region15: #{tpu_custom_call.1} parent=11 // pred_region
        _
      $region16: #{tpu_custom_call.1} parent=11 // pred_fallthru
        _
      // Predicated region
      $region17: #{tpu_custom_call.1} parent=11 // pred_check
        %p214 = pneg %p107
      $region18: #{tpu_custom_call.1} parent=11 // pred_check_branch
        %216 = sbr.rel (%p214) target = $region20
      $region19: #{tpu_custom_call.1} parent=11 // pred_region
        _
      $region20: #{tpu_custom_call.1} parent=11 // pred_fallthru
        _
      // Predicated region
      $region21: #{tpu_custom_call.1} parent=11 // pred_check
        %p217 = pneg %p128
      $region22: #{tpu_custom_call.1} parent=11 // pred_check_branch
        %219 = sbr.rel (%p217) target = $region24
      $region23: #{tpu_custom_call.1} parent=11 // pred_region
        _
      $region24: #{tpu_custom_call.1} parent=11 // pred_fallthru
        _
      // Predicated region
      $region25: #{tpu_custom_call.1} parent=11 // pred_check
        %p220 = pneg %p149
      $region26: #{tpu_custom_call.1} parent=11 // pred_check_branch
        %222 = sbr.rel (%p220) target = $region28
      $region27: #{tpu_custom_call.1} parent=11 // pred_region
        _
      $region28: #{tpu_custom_call.1} parent=11 // pred_fallthru
        _
      // Predicated region
      $region29: #{tpu_custom_call.1} parent=11 // pred_check
        %p223 = pneg %p170
      $region30: #{tpu_custom_call.1} parent=11 // pred_check_branch
        %225 = sbr.rel (%p223) target = $region32
      $region31: #{tpu_custom_call.1} parent=11 // pred_region
        _
      $region32: #{tpu_custom_call.1} parent=11 // pred_fallthru
        _
    $region12: #{tpu_custom_call.1} parent=5 // pred_fallthru
      _
    %p226 = scmp.lt.s32.totalorder %s13, 2
    // Predicated region
    $region33: #{tpu_custom_call.1} parent=5 // pred_check
      %p227 = pneg %p226
    $region34: #{tpu_custom_call.1} parent=5 // pred_check_branch
      %229 = sbr.rel (%p227) target = $region36
    $region35: #{tpu_custom_call.1} parent=5 // pred_region
      // Predicated region
      $region37: #{tpu_custom_call.1} parent=35 // pred_check
        %p230 = pneg %p54
      $region38: #{tpu_custom_call.1} parent=35 // pred_check_branch
        %232 = sbr.rel (%p230) target = $region40
      $region39: #{tpu_custom_call.1} parent=35 // pred_region
        %p233 = scmp.lt.s32.totalorder %s13, 1
        %s234 = scalar_select %p233, %s13, 1
        %s235 = smul.addr %s234, 16
        %s236 = smul.addr %s235, 8
        %s237 = scalar_lea.vmem %s1, %s236
      $region40: #{tpu_custom_call.1} parent=35 // pred_fallthru
        _
      // Predicated region
      $region41: #{tpu_custom_call.1} parent=35 // pred_check
        %p238 = pneg %p80
      $region42: #{tpu_custom_call.1} parent=35 // pred_check_branch
        %240 = sbr.rel (%p238) target = $region44
      $region43: #{tpu_custom_call.1} parent=35 // pred_region
        %p241 = scmp.lt.s32.totalorder %s13, 1
        %s242 = scalar_select %p241, %s13, 1
        %s243 = smul.addr %s242, 32
        %s244 = smul.addr %s243, 8
        %s245 = scalar_lea.vmem %s2, %s244
      $region44: #{tpu_custom_call.1} parent=35 // pred_fallthru
        _
    $region36: #{tpu_custom_call.1} parent=5 // pred_fallthru
      _
    %p246 = scmp.le.s32.totalorder 1, %s13
    %p247 = scmp.lt.s32.totalorder %s13, 3
    %p248 = pnand %p246, %p247
    %p249 = pneg %p248
    // Predicated region
    $region45: #{tpu_custom_call.1} parent=5 // pred_check
      _
    $region46: #{tpu_custom_call.1} parent=5 // pred_check_branch
      %251 = sbr.rel (%p248) target = $region48
    $region47: #{tpu_custom_call.1} parent=5 // pred_region
      %s252 = ssub.s32 %s13, 1
      %p253 = pneg %p34
      %p254 = pneg %p31
      %p255 = scmp.lt.s32.totalorder %s18, 1
      %s256 = scalar_select %p255, %s18, 1
      %s257 = smul.addr %s256, 16
      %s258 = smul.addr %s257, 8
      %s259 = scalar_lea.vmem %s1, %s258
      %p260 = pneg %p60
      %p261 = pneg %p57
      %p262 = scmp.lt.s32.totalorder %s18, 1
      %s263 = scalar_select %p262, %s18, 1
      %s264 = smul.addr %s263, 32
      %s265 = smul.addr %s264, 8
      %s266 = scalar_lea.vmem %s2, %s265
      %p267 = pneg %p86
      %p268 = pneg %p83
      %p269 = pneg %p107
      %p270 = pneg %p104
      %p271 = pneg %p128
      %p272 = pneg %p125
      %p273 = pneg %p149
      %p274 = pneg %p146
      %p275 = pneg %p170
      %p276 = pneg %p167
      %p277 = pneg %p196
      %p278 = pneg %p193
      %p279 = scmp.lt.s32.totalorder %s18, 1
      %s280 = scalar_select %p279, %s18, 1
      %s281 = smul.addr %s280, 32
      %s282 = smul.addr %s281, 8
      %s283 = scalar_lea.vmem %s7, %s282
      %p284 = scmp.lt.s32.totalorder %s18, 1
      %s285 = scalar_select %p284, %s18, 1
      %s286 = smul.addr %s285, 16
      %s287 = smul.addr %s286, 8
      %s288 = scalar_lea.vmem %s1, %s287
      %p289 = scmp.lt.s32.totalorder %s18, 1
      %s290 = scalar_select %p289, %s18, 1
      %s291 = smul.addr %s290, 32
      %s292 = smul.addr %s291, 8
      %s293 = scalar_lea.vmem %s2, %s292
      %p294 = scmp.lt.s32.totalorder %s18, 1
      %s295 = scalar_select %p294, %s18, 1
      %s296 = smul.addr %s295, 32
      %s297 = smul.addr %s296, 8
      %s298 = scalar_lea.vmem %s7, %s297
      %v299 = vld [vmem:[%s0] sm:$0xff]
      %v300 = vld [vmem:[%s0 + $0x8] sm:$0xff]
      %v301 = vld [vmem:[%s0 + $0x10] sm:$0xff]
      %v302 = vld [vmem:[%s0 + $0x18] sm:$0xff]
      %v303 = vld [vmem:[%s0 + $0x20] sm:$0xff]
      %v304 = vld [vmem:[%s0 + $0x28] sm:$0xff]
      %v305 = vld [vmem:[%s0 + $0x30] sm:$0xff]
      %v306 = vld [vmem:[%s0 + $0x38] sm:$0xff]
      %v307 = vld [vmem:[%s0 + $0x40] sm:$0xff]
      %v308 = vld [vmem:[%s0 + $0x48] sm:$0xff]
      %v309 = vld [vmem:[%s0 + $0x50] sm:$0xff]
      %v310 = vld [vmem:[%s0 + $0x58] sm:$0xff]
      %v311 = vld [vmem:[%s0 + $0x60] sm:$0xff]
      %v312 = vld [vmem:[%s0 + $0x68] sm:$0xff]
      %v313 = vld [vmem:[%s0 + $0x70] sm:$0xff]
      %v314 = vld [vmem:[%s0 + $0x78] sm:$0xff]
      %v315 = vld [vmem:[%s0 + $0x80] sm:$0xff]
      %v316 = vld [vmem:[%s0 + $0x88] sm:$0xff]
      %v317 = vld [vmem:[%s0 + $0x90] sm:$0xff]
      %v318 = vld [vmem:[%s0 + $0x98] sm:$0xff]
      %v319 = vld [vmem:[%s0 + $0xa0] sm:$0xff]
      %v320 = vld [vmem:[%s0 + $0xa8] sm:$0xff]
      %v321 = vld [vmem:[%s0 + $0xb0] sm:$0xff]
      %v322 = vld [vmem:[%s0 + $0xb8] sm:$0xff]
      %v323 = vld [vmem:[%s0 + $0xc0] sm:$0xff]
      %v324 = vld [vmem:[%s0 + $0xc8] sm:$0xff]
      %v325 = vld [vmem:[%s0 + $0xd0] sm:$0xff]
      %v326 = vld [vmem:[%s0 + $0xd8] sm:$0xff]
      %v327 = vld [vmem:[%s0 + $0xe0] sm:$0xff]
      %v328 = vld [vmem:[%s0 + $0xe8] sm:$0xff]
      %v329 = vld [vmem:[%s0 + $0xf0] sm:$0xff]
      %v330 = vld [vmem:[%s0 + $0xf8] sm:$0xff]
      %v331 = vld [vmem:[%s288] sm:$0xff]
      %v332 = vld [vmem:[%s288 + $0x8] sm:$0xff]
      %v333 = vld [vmem:[%s288 + $0x10] sm:$0xff]
      %v334 = vld [vmem:[%s288 + $0x18] sm:$0xff]
      %v335 = vld [vmem:[%s288 + $0x20] sm:$0xff]
      %v336 = vld [vmem:[%s288 + $0x28] sm:$0xff]
      %v337 = vld [vmem:[%s288 + $0x30] sm:$0xff]
      %v338 = vld [vmem:[%s288 + $0x38] sm:$0xff]
      %v339 = vld [vmem:[%s288 + $0x40] sm:$0xff]
      %v340 = vld [vmem:[%s288 + $0x48] sm:$0xff]
      %v341 = vld [vmem:[%s288 + $0x50] sm:$0xff]
      %v342 = vld [vmem:[%s288 + $0x58] sm:$0xff]
      %v343 = vld [vmem:[%s288 + $0x60] sm:$0xff]
      %v344 = vld [vmem:[%s288 + $0x68] sm:$0xff]
      %v345 = vld [vmem:[%s288 + $0x70] sm:$0xff]
      %v346 = vld [vmem:[%s288 + $0x78] sm:$0xff]
      %vm347 = vcmask 64512
      %v349 = vsel %vm347, %v299, 0
      %v352 = vsel %vm347, %v300, 0
      %354 = vmatprep.subr.mxu0 0.0
      %355 = vmatpush1.msra.mxu0 %v331
      %356 = vmatprep.subr.mxu0 0.0
      %357 = vmatpush1.msra.mxu0 0.0
      %358 = vmatprep.subr.mxu0 0.0
      %359 = vmatpush1.msra.mxu0 0.0
      %360 = vmatprep.subr.mxu0 0.0
      %361 = vmatpush1.msra.mxu0 0.0
      %362 = vmatprep.subr.mxu0 0.0
      %363 = vmatpush1.msra.mxu0 0.0
      %364 = vmatprep.subr.mxu0 0.0
      %365 = vmatpush1.msra.mxu0 0.0
      %366 = vmatprep.subr.mxu0 0.0
      %367 = vmatpush1.msra.mxu0 0.0
      %368 = vmatprep.subr.mxu0 0.0
      %369 = vmatpush1.msra.mxu0 0.0
      %370 = vmatprep.subr.mxu0 0.0
      %371 = vmatpush1.msra.mxu0 0.0
      %372 = vmatprep.subr.mxu0 0.0
      %373 = vmatpush1.msra.mxu0 0.0
      %374 = vmatprep.subr.mxu0 0.0
      %375 = vmatpush1.msra.mxu0 0.0
      %376 = vmatprep.subr.mxu0 0.0
      %377 = vmatpush1.msra.mxu0 0.0
      %378 = vmatprep.subr.mxu0 0.0
      %379 = vmatpush1.msra.mxu0 0.0
      %380 = vmatprep.subr.mxu0 0.0
      %381 = vmatpush1.msra.mxu0 0.0
      %382 = vmatprep.subr.mxu0 0.0
      %383 = vmatpush1.msra.mxu0 0.0
      %384 = vmatprep.subr.mxu0 0.0
      %385 = vmatpush1.msra.mxu0 0.0
      %386 = vmatprep.subr.mxu0 0.0
      %387 = vmatpush1.msra.mxu0 0.0
      %388 = vmatprep.subr.mxu0 0.0
      %389 = vmatpush1.msra.mxu0 0.0
      %390 = vmatprep.subr.mxu0 0.0
      %391 = vmatpush1.msra.mxu0 0.0
      %392 = vmatprep.subr.mxu0 0.0
      %393 = vmatpush1.msra.mxu0 0.0
      %394 = vmatprep.subr.mxu0 0.0
      %395 = vmatpush1.msra.mxu0 0.0
      %396 = vmatprep.subr.mxu0 0.0
      %397 = vmatpush1.msra.mxu0 0.0
      %398 = vmatprep.subr.mxu0 0.0
      %399 = vmatpush1.msra.mxu0 0.0
      %400 = vmatprep.subr.mxu0 0.0
      %401 = vmatpush1.msra.mxu0 0.0
      %402 = vmatprep.subr.mxu0 0.0
      %403 = vmatpush1.msra.mxu0 0.0
      %404 = vmatprep.subr.mxu0 0.0
      %405 = vmatpush1.msra.mxu0 0.0
      %406 = vmatprep.subr.mxu0 0.0
      %407 = vmatpush1.msra.mxu0 0.0
      %408 = vmatprep.subr.mxu0 0.0
      %409 = vmatpush1.msra.mxu0 0.0
      %410 = vmatprep.subr.mxu0 0.0
      %411 = vmatpush1.msra.mxu0 0.0
      %412 = vmatprep.subr.mxu0 0.0
      %413 = vmatpush1.msra.mxu0 0.0
      %414 = vmatprep.subr.mxu0 0.0
      %415 = vmatpush1.msra.mxu0 0.0
      %416 = vmatprep.subr.mxu0 0.0
      %417 = vmatpush1.msra.mxu0 0.0
      %418 = vmatprep.mubr.f32.mxu0 0.0
      %419 = vmatmul.mubr.f32.gmra.mrb[0].mxu0 %v349
      %v420 = vpop.f32.mrb[0].mxu0
      %v421 = vadd.f32 0.0, %v420
      %v422 = vpop.f32.mrb[0].mxu0
      %423 = vmatprep.mubr.f32.mxu0 0.0
      %424 = vmatmul.mubr.f32.gmra.mrb[0].mxu0 %v352
      %v425 = vpop.f32.mrb[0].mxu0
      %v426 = vadd.f32 0.0, %v425
      %v427 = vpop.f32.mrb[0].mxu0
      %428 = vdwg.mxu0
      %v430 = vsel %vm347, %v301, 0
      %v433 = vsel %vm347, %v302, 0
      %435 = vmatprep.subr.mxu0 0.0
      %436 = vmatpush1.msra.mxu0 %v332
      %437 = vmatprep.subr.mxu0 0.0
      %438 = vmatpush1.msra.mxu0 0.0
      %439 = vmatprep.subr.mxu0 0.0
      %440 = vmatpush1.msra.mxu0 0.0
      %441 = vmatprep.subr.mxu0 0.0
      %442 = vmatpush1.msra.mxu0 0.0
      %443 = vmatprep.subr.mxu0 0.0
      %444 = vmatpush1.msra.mxu0 0.0
      %445 = vmatprep.subr.mxu0 0.0
      %446 = vmatpush1.msra.mxu0 0.0
      %447 = vmatprep.subr.mxu0 0.0
      %448 = vmatpush1.msra.mxu0 0.0
      %449 = vmatprep.subr.mxu0 0.0
      %450 = vmatpush1.msra.mxu0 0.0
      %451 = vmatprep.subr.mxu0 0.0
      %452 = vmatpush1.msra.mxu0 0.0
      %453 = vmatprep.subr.mxu0 0.0
      %454 = vmatpush1.msra.mxu0 0.0
      %455 = vmatprep.subr.mxu0 0.0
      %456 = vmatpush1.msra.mxu0 0.0
      %457 = vmatprep.subr.mxu0 0.0
      %458 = vmatpush1.msra.mxu0 0.0
      %459 = vmatprep.subr.mxu0 0.0
      %460 = vmatpush1.msra.mxu0 0.0
      %461 = vmatprep.subr.mxu0 0.0
      %462 = vmatpush1.msra.mxu0 0.0
      %463 = vmatprep.subr.mxu0 0.0
      %464 = vmatpush1.msra.mxu0 0.0
      %465 = vmatprep.subr.mxu0 0.0
      %466 = vmatpush1.msra.mxu0 0.0
      %467 = vmatprep.subr.mxu0 0.0
      %468 = vmatpush1.msra.mxu0 0.0
      %469 = vmatprep.subr.mxu0 0.0
      %470 = vmatpush1.msra.mxu0 0.0
      %471 = vmatprep.subr.mxu0 0.0
      %472 = vmatpush1.msra.mxu0 0.0
      %473 = vmatprep.subr.mxu0 0.0
      %474 = vmatpush1.msra.mxu0 0.0
      %475 = vmatprep.subr.mxu0 0.0
      %476 = vmatpush1.msra.mxu0 0.0
      %477 = vmatprep.subr.mxu0 0.0
      %478 = vmatpush1.msra.mxu0 0.0
      %479 = vmatprep.subr.mxu0 0.0
      %480 = vmatpush1.msra.mxu0 0.0
      %481 = vmatprep.subr.mxu0 0.0
      %482 = vmatpush1.msra.mxu0 0.0
      %483 = vmatprep.subr.mxu0 0.0
      %484 = vmatpush1.msra.mxu0 0.0
      %485 = vmatprep.subr.mxu0 0.0
      %486 = vmatpush1.msra.mxu0 0.0
      %487 = vmatprep.subr.mxu0 0.0
      %488 = vmatpush1.msra.mxu0 0.0
      %489 = vmatprep.subr.mxu0 0.0
      %490 = vmatpush1.msra.mxu0 0.0
      %491 = vmatprep.subr.mxu0 0.0
      %492 = vmatpush1.msra.mxu0 0.0
      %493 = vmatprep.subr.mxu0 0.0
      %494 = vmatpush1.msra.mxu0 0.0
      %495 = vmatprep.subr.mxu0 0.0
      %496 = vmatpush1.msra.mxu0 0.0
      %497 = vmatprep.subr.mxu0 0.0
      %498 = vmatpush1.msra.mxu0 0.0
      %499 = vmatprep.mubr.f32.mxu0 0.0
      %500 = vmatmul.mubr.f32.gmra.mrb[0].mxu0 %v430
      %v501 = vpop.f32.mrb[0].mxu0
      %v502 = vadd.f32 0.0, %v501
      %v503 = vpop.f32.mrb[0].mxu0
      %504 = vmatprep.mubr.f32.mxu0 0.0
      %505 = vmatmul.mubr.f32.gmra.mrb[0].mxu0 %v433
      %v506 = vpop.f32.mrb[0].mxu0
      %v507 = vadd.f32 0.0, %v506
      %v508 = vpop.f32.mrb[0].mxu0
      %509 = vdwg.mxu0
      %v511 = vsel %vm347, %v303, 0
      %v514 = vsel %vm347, %v304, 0
      %516 = vmatprep.subr.mxu0 0.0
      %517 = vmatpush1.msra.mxu0 %v333
      %518 = vmatprep.subr.mxu0 0.0
      %519 = vmatpush1.msra.mxu0 0.0
      %520 = vmatprep.subr.mxu0 0.0
      %521 = vmatpush1.msra.mxu0 0.0
      %522 = vmatprep.subr.mxu0 0.0
      %523 = vmatpush1.msra.mxu0 0.0
      %524 = vmatprep.subr.mxu0 0.0
      %525 = vmatpush1.msra.mxu0 0.0
      %526 = vmatprep.subr.mxu0 0.0
      %527 = vmatpush1.msra.mxu0 0.0
      %528 = vmatprep.subr.mxu0 0.0
      %529 = vmatpush1.msra.mxu0 0.0
      %530 = vmatprep.subr.mxu0 0.0
      %531 = vmatpush1.msra.mxu0 0.0
      %532 = vmatprep.subr.mxu0 0.0
      %533 = vmatpush1.msra.mxu0 0.0
      %534 = vmatprep.subr.mxu0 0.0
      %535 = vmatpush1.msra.mxu0 0.0
      %536 = vmatprep.subr.mxu0 0.0
      %537 = vmatpush1.msra.mxu0 0.0
      %538 = vmatprep.subr.mxu0 0.0
      %539 = vmatpush1.msra.mxu0 0.0
      %540 = vmatprep.subr.mxu0 0.0
      %541 = vmatpush1.msra.mxu0 0.0
      %542 = vmatprep.subr.mxu0 0.0
      %543 = vmatpush1.msra.mxu0 0.0
      %544 = vmatprep.subr.mxu0 0.0
      %545 = vmatpush1.msra.mxu0 0.0
      %546 = vmatprep.subr.mxu0 0.0
      %547 = vmatpush1.msra.mxu0 0.0
      %548 = vmatprep.subr.mxu0 0.0
      %549 = vmatpush1.msra.mxu0 0.0
      %550 = vmatprep.subr.mxu0 0.0
      %551 = vmatpush1.msra.mxu0 0.0
      %552 = vmatprep.subr.mxu0 0.0
      %553 = vmatpush1.msra.mxu0 0.0
      %554 = vmatprep.subr.mxu0 0.0
      %555 = vmatpush1.msra.mxu0 0.0
      %556 = vmatprep.subr.mxu0 0.0
      %557 = vmatpush1.msra.mxu0 0.0
      %558 = vmatprep.subr.mxu0 0.0
      %559 = vmatpush1.msra.mxu0 0.0
      %560 = vmatprep.subr.mxu0 0.0
      %561 = vmatpush1.msra.mxu0 0.0
      %562 = vmatprep.subr.mxu0 0.0
      %563 = vmatpush1.msra.mxu0 0.0
      %564 = vmatprep.subr.mxu0 0.0
      %565 = vmatpush1.msra.mxu0 0.0
      %566 = vmatprep.subr.mxu0 0.0
      %567 = vmatpush1.msra.mxu0 0.0
      %568 = vmatprep.subr.mxu0 0.0
      %569 = vmatpush1.msra.mxu0 0.0
      %570 = vmatprep.subr.mxu0 0.0
      %571 = vmatpush1.msra.mxu0 0.0
      %572 = vmatprep.subr.mxu0 0.0
      %573 = vmatpush1.msra.mxu0 0.0
      %574 = vmatprep.subr.mxu0 0.0
      %575 = vmatpush1.msra.mxu0 0.0
      %576 = vmatprep.subr.mxu0 0.0
      %577 = vmatpush1.msra.mxu0 0.0
      %578 = vmatprep.subr.mxu0 0.0
      %579 = vmatpush1.msra.mxu0 0.0
      %580 = vmatprep.mubr.f32.mxu0 0.0
      %581 = vmatmul.mubr.f32.gmra.mrb[0].mxu0 %v511
      %v582 = vpop.f32.mrb[0].mxu0
      %v583 = vadd.f32 0.0, %v582
      %v584 = vpop.f32.mrb[0].mxu0
      %585 = vmatprep.mubr.f32.mxu0 0.0
      %586 = vmatmul.mubr.f32.gmra.mrb[0].mxu0 %v514
      %v587 = vpop.f32.mrb[0].mxu0
      %v588 = vadd.f32 0.0, %v587
      %v589 = vpop.f32.mrb[0].mxu0
      %590 = vdwg.mxu0
      %v592 = vsel %vm347, %v305, 0
      %v595 = vsel %vm347, %v306, 0
      %597 = vmatprep.subr.mxu0 0.0
      %598 = vmatpush1.msra.mxu0 %v334
      %599 = vmatprep.subr.mxu0 0.0
      %600 = vmatpush1.msra.mxu0 0.0
      %601 = vmatprep.subr.mxu0 0.0
      %602 = vmatpush1.msra.mxu0 0.0
      %603 = vmatprep.subr.mxu0 0.0
      %604 = vmatpush1.msra.mxu0 0.0
      %605 = vmatprep.subr.mxu0 0.0
      %606 = vmatpush1.msra.mxu0 0.0
      %607 = vmatprep.subr.mxu0 0.0
      %608 = vmatpush1.msra.mxu0 0.0
      %609 = vmatprep.subr.mxu0 0.0
      %610 = vmatpush1.msra.mxu0 0.0
      %611 = vmatprep.subr.mxu0 0.0
      %612 = vmatpush1.msra.mxu0 0.0
      %613 = vmatprep.subr.mxu0 0.0
      %614 = vmatpush1.msra.mxu0 0.0
      %615 = vmatprep.subr.mxu0 0.0
      %616 = vmatpush1.msra.mxu0 0.0
      %617 = vmatprep.subr.mxu0 0.0
      %618 = vmatpush1.msra.mxu0 0.0
      %619 = vmatprep.subr.mxu0 0.0
      %620 = vmatpush1.msra.mxu0 0.0
      %621 = vmatprep.subr.mxu0 0.0
      %622 = vmatpush1.msra.mxu0 0.0
      %623 = vmatprep.subr.mxu0 0.0
      %624 = vmatpush1.msra.mxu0 0.0
      %625 = vmatprep.subr.mxu0 0.0
      %626 = vmatpush1.msra.mxu0 0.0
      %627 = vmatprep.subr.mxu0 0.0
      %628 = vmatpush1.msra.mxu0 0.0
      %629 = vmatprep.subr.mxu0 0.0
      %630 = vmatpush1.msra.mxu0 0.0
      %631 = vmatprep.subr.mxu0 0.0
      %632 = vmatpush1.msra.mxu0 0.0
      %633 = vmatprep.subr.mxu0 0.0
      %634 = vmatpush1.msra.mxu0 0.0
      %635 = vmatprep.subr.mxu0 0.0
      %636 = vmatpush1.msra.mxu0 0.0
      %637 = vmatprep.subr.mxu0 0.0
      %638 = vmatpush1.msra.mxu0 0.0
      %639 = vmatprep.subr.mxu0 0.0
      %640 = vmatpush1.msra.mxu0 0.0
      %641 = vmatprep.subr.mxu0 0.0
      %642 = vmatpush1.msra.mxu0 0.0
      %643 = vmatprep.subr.mxu0 0.0
      %644 = vmatpush1.msra.mxu0 0.0
      %645 = vmatprep.subr.mxu0 0.0
      %646 = vmatpush1.msra.mxu0 0.0
      %647 = vmatprep.subr.mxu0 0.0
      %648 = vmatpush1.msra.mxu0 0.0
      %649 = vmatprep.subr.mxu0 0.0
      %650 = vmatpush1.msra.mxu0 0.0
      %651 = vmatprep.subr.mxu0 0.0
      %652 = vmatpush1.msra.mxu0 0.0
      %653 = vmatprep.subr.mxu0 0.0
      %654 = vmatpush1.msra.mxu0 0.0
      %655 = vmatprep.subr.mxu0 0.0
      %656 = vmatpush1.msra.mxu0 0.0
      %657 = vmatprep.subr.mxu0 0.0
      %658 = vmatpush1.msra.mxu0 0.0
      %659 = vmatprep.subr.mxu0 0.0
      %660 = vmatpush1.msra.mxu0 0.0
      %661 = vmatprep.mubr.f32.mxu0 0.0
      %662 = vmatmul.mubr.f32.gmra.mrb[0].mxu0 %v592
      %v663 = vpop.f32.mrb[0].mxu0
      %v664 = vadd.f32 0.0, %v663
      %v665 = vpop.f32.mrb[0].mxu0
      %666 = vmatprep.mubr.f32.mxu0 0.0
      %667 = vmatmul.mubr.f32.gmra.mrb[0].mxu0 %v595
      %v668 = vpop.f32.mrb[0].mxu0
      %v669 = vadd.f32 0.0, %v668
      %v670 = vpop.f32.mrb[0].mxu0
      %671 = vdwg.mxu0
      %v673 = vsel %vm347, %v307, 0
      %v676 = vsel %vm347, %v308, 0
      %678 = vmatprep.subr.mxu0 0.0
      %679 = vmatpush1.msra.mxu0 %v335
      %680 = vmatprep.subr.mxu0 0.0
      %681 = vmatpush1.msra.mxu0 0.0
      %682 = vmatprep.subr.mxu0 0.0
      %683 = vmatpush1.msra.mxu0 0.0
      %684 = vmatprep.subr.mxu0 0.0
      %685 = vmatpush1.msra.mxu0 0.0
      %686 = vmatprep.subr.mxu0 0.0
      %687 = vmatpush1.msra.mxu0 0.0
      %688 = vmatprep.subr.mxu0 0.0
      %689 = vmatpush1.msra.mxu0 0.0
      %690 = vmatprep.subr.mxu0 0.0
      %691 = vmatpush1.msra.mxu0 0.0
      %692 = vmatprep.subr.mxu0 0.0
      %693 = vmatpush1.msra.mxu0 0.0
      %694 = vmatprep.subr.mxu0 0.0
      %695 = vmatpush1.msra.mxu0 0.0
      %696 = vmatprep.subr.mxu0 0.0
      %697 = vmatpush1.msra.mxu0 0.0
      %698 = vmatprep.subr.mxu0 0.0
      %699 = vmatpush1.msra.mxu0 0.0
      %700 = vmatprep.subr.mxu0 0.0
      %701 = vmatpush1.msra.mxu0 0.0
      %702 = vmatprep.subr.mxu0 0.0
      %703 = vmatpush1.msra.mxu0 0.0
      %704 = vmatprep.subr.mxu0 0.0
      %705 = vmatpush1.msra.mxu0 0.0
      %706 = vmatprep.subr.mxu0 0.0
      %707 = vmatpush1.msra.mxu0 0.0
      %708 = vmatprep.subr.mxu0 0.0
      %709 = vmatpush1.msra.mxu0 0.0
      %710 = vmatprep.subr.mxu0 0.0
      %711 = vmatpush1.msra.mxu0 0.0
      %712 = vmatprep.subr.mxu0 0.0
      %713 = vmatpush1.msra.mxu0 0.0
      %714 = vmatprep.subr.mxu0 0.0
      %715 = vmatpush1.msra.mxu0 0.0
      %716 = vmatprep.subr.mxu0 0.0
      %717 = vmatpush1.msra.mxu0 0.0
      %718 = vmatprep.subr.mxu0 0.0
      %719 = vmatpush1.msra.mxu0 0.0
      %720 = vmatprep.subr.mxu0 0.0
      %721 = vmatpush1.msra.mxu0 0.0
      %722 = vmatprep.subr.mxu0 0.0
      %723 = vmatpush1.msra.mxu0 0.0
      %724 = vmatprep.subr.mxu0 0.0
      %725 = vmatpush1.msra.mxu0 0.0
      %726 = vmatprep.subr.mxu0 0.0
      %727 = vmatpush1.msra.mxu0 0.0
      %728 = vmatprep.subr.mxu0 0.0
      %729 = vmatpush1.msra.mxu0 0.0
      %730 = vmatprep.subr.mxu0 0.0
      %731 = vmatpush1.msra.mxu0 0.0
      %732 = vmatprep.subr.mxu0 0.0
      %733 = vmatpush1.msra.mxu0 0.0
      %734 = vmatprep.subr.mxu0 0.0
      %735 = vmatpush1.msra.mxu0 0.0
      %736 = vmatprep.subr.mxu0 0.0
      %737 = vmatpush1.msra.mxu0 0.0
      %738 = vmatprep.subr.mxu0 0.0
      %739 = vmatpush1.msra.mxu0 0.0
      %740 = vmatprep.subr.mxu0 0.0
      %741 = vmatpush1.msra.mxu0 0.0
      %742 = vmatprep.mubr.f32.mxu0 0.0
      %743 = vmatmul.mubr.f32.gmra.mrb[0].mxu0 %v673
      %v744 = vpop.f32.mrb[0].mxu0
      %v745 = vadd.f32 0.0, %v744
      %v746 = vpop.f32.mrb[0].mxu0
      %747 = vmatprep.mubr.f32.mxu0 0.0
      %748 = vmatmul.mubr.f32.gmra.mrb[0].mxu0 %v676
      %v749 = vpop.f32.mrb[0].mxu0
      %v750 = vadd.f32 0.0, %v749
      %v751 = vpop.f32.mrb[0].mxu0
      %752 = vdwg.mxu0
      %v754 = vsel %vm347, %v309, 0
      %v757 = vsel %vm347, %v310, 0
      %759 = vmatprep.subr.mxu0 0.0
      %760 = vmatpush1.msra.mxu0 %v336
      %761 = vmatprep.subr.mxu0 0.0
      %762 = vmatpush1.msra.mxu0 0.0
      %763 = vmatprep.subr.mxu0 0.0
      %764 = vmatpush1.msra.mxu0 0.0
      %765 = vmatprep.subr.mxu0 0.0
      %766 = vmatpush1.msra.mxu0 0.0
      %767 = vmatprep.subr.mxu0 0.0
      %768 = vmatpush1.msra.mxu0 0.0
      %769 = vmatprep.subr.mxu0 0.0
      %770 = vmatpush1.msra.mxu0 0.0
      %771 = vmatprep.subr.mxu0 0.0
      %772 = vmatpush1.msra.mxu0 0.0
      %773 = vmatprep.subr.mxu0 0.0
      %774 = vmatpush1.msra.mxu0 0.0
      %775 = vmatprep.subr.mxu0 0.0
      %776 = vmatpush1.msra.mxu0 0.0
      %777 = vmatprep.subr.mxu0 0.0
      %778 = vmatpush1.msra.mxu0 0.0
      %779 = vmatprep.subr.mxu0 0.0
      %780 = vmatpush1.msra.mxu0 0.0
      %781 = vmatprep.subr.mxu0 0.0
      %782 = vmatpush1.msra.mxu0 0.0
      %783 = vmatprep.subr.mxu0 0.0
      %784 = vmatpush1.msra.mxu0 0.0
      %785 = vmatprep.subr.mxu0 0.0
      %786 = vmatpush1.msra.mxu0 0.0
      %787 = vmatprep.subr.mxu0 0.0
      %788 = vmatpush1.msra.mxu0 0.0
      %789 = vmatprep.subr.mxu0 0.0
      %790 = vmatpush1.msra.mxu0 0.0
      %791 = vmatprep.subr.mxu0 0.0
      %792 = vmatpush1.msra.mxu0 0.0
      %793 = vmatprep.subr.mxu0 0.0
      %794 = vmatpush1.msra.mxu0 0.0
      %795 = vmatprep.subr.mxu0 0.0
      %796 = vmatpush1.msra.mxu0 0.0
      %797 = vmatprep.subr.mxu0 0.0
      %798 = vmatpush1.msra.mxu0 0.0
      %799 = vmatprep.subr.mxu0 0.0
      %800 = vmatpush1.msra.mxu0 0.0
      %801 = vmatprep.subr.mxu0 0.0
      %802 = vmatpush1.msra.mxu0 0.0
      %803 = vmatprep.subr.mxu0 0.0
      %804 = vmatpush1.msra.mxu0 0.0
      %805 = vmatprep.subr.mxu0 0.0
      %806 = vmatpush1.msra.mxu0 0.0
      %807 = vmatprep.subr.mxu0 0.0
      %808 = vmatpush1.msra.mxu0 0.0
      %809 = vmatprep.subr.mxu0 0.0
      %810 = vmatpush1.msra.mxu0 0.0
      %811 = vmatprep.subr.mxu0 0.0
      %812 = vmatpush1.msra.mxu0 0.0
      %813 = vmatprep.subr.mxu0 0.0
      %814 = vmatpush1.msra.mxu0 0.0
      %815 = vmatprep.subr.mxu0 0.0
      %816 = vmatpush1.msra.mxu0 0.0
      %817 = vmatprep.subr.mxu0 0.0
      %818 = vmatpush1.msra.mxu0 0.0
      %819 = vmatprep.subr.mxu0 0.0
      %820 = vmatpush1.msra.mxu0 0.0
      %821 = vmatprep.subr.mxu0 0.0
      %822 = vmatpush1.msra.mxu0 0.0
      %823 = vmatprep.mubr.f32.mxu0 0.0
      %824 = vmatmul.mubr.f32.gmra.mrb[0].mxu0 %v754
      %v825 = vpop.f32.mrb[0].mxu0
      %v826 = vadd.f32 0.0, %v825
      %v827 = vpop.f32.mrb[0].mxu0
      %828 = vmatprep.mubr.f32.mxu0 0.0
      %829 = vmatmul.mubr.f32.gmra.mrb[0].mxu0 %v757
      %v830 = vpop.f32.mrb[0].mxu0
      %v831 = vadd.f32 0.0, %v830
      %v832 = vpop.f32.mrb[0].mxu0
      %833 = vdwg.mxu0
      %v835 = vsel %vm347, %v311, 0
      %v838 = vsel %vm347, %v312, 0
      %840 = vmatprep.subr.mxu0 0.0
      %841 = vmatpush1.msra.mxu0 %v337
      %842 = vmatprep.subr.mxu0 0.0
      %843 = vmatpush1.msra.mxu0 0.0
      %844 = vmatprep.subr.mxu0 0.0
      %845 = vmatpush1.msra.mxu0 0.0
      %846 = vmatprep.subr.mxu0 0.0
      %847 = vmatpush1.msra.mxu0 0.0
      %848 = vmatprep.subr.mxu0 0.0
      %849 = vmatpush1.msra.mxu0 0.0
      %850 = vmatprep.subr.mxu0 0.0
      %851 = vmatpush1.msra.mxu0 0.0
      %852 = vmatprep.subr.mxu0 0.0
      %853 = vmatpush1.msra.mxu0 0.0
      %854 = vmatprep.subr.mxu0 0.0
      %855 = vmatpush1.msra.mxu0 0.0
      %856 = vmatprep.subr.mxu0 0.0
      %857 = vmatpush1.msra.mxu0 0.0
      %858 = vmatprep.subr.mxu0 0.0
      %859 = vmatpush1.msra.mxu0 0.0
      %860 = vmatprep.subr.mxu0 0.0
      %861 = vmatpush1.msra.mxu0 0.0
      %862 = vmatprep.subr.mxu0 0.0
      %863 = vmatpush1.msra.mxu0 0.0
      %864 = vmatprep.subr.mxu0 0.0
      %865 = vmatpush1.msra.mxu0 0.0
      %866 = vmatprep.subr.mxu0 0.0
      %867 = vmatpush1.msra.mxu0 0.0
      %868 = vmatprep.subr.mxu0 0.0
      %869 = vmatpush1.msra.mxu0 0.0
      %870 = vmatprep.subr.mxu0 0.0
      %871 = vmatpush1.msra.mxu0 0.0
      %872 = vmatprep.subr.mxu0 0.0
      %873 = vmatpush1.msra.mxu0 0.0
      %874 = vmatprep.subr.mxu0 0.0
      %875 = vmatpush1.msra.mxu0 0.0
      %876 = vmatprep.subr.mxu0 0.0
      %877 = vmatpush1.msra.mxu0 0.0
      %878 = vmatprep.subr.mxu0 0.0
      %879 = vmatpush1.msra.mxu0 0.0
      %880 = vmatprep.subr.mxu0 0.0
      %881 = vmatpush1.msra.mxu0 0.0
      %882 = vmatprep.subr.mxu0 0.0
      %883 = vmatpush1.msra.mxu0 0.0
      %884 = vmatprep.subr.mxu0 0.0
      %885 = vmatpush1.msra.mxu0 0.0
      %886 = vmatprep.subr.mxu0 0.0
      %887 = vmatpush1.msra.mxu0 0.0
      %888 = vmatprep.subr.mxu0 0.0
      %889 = vmatpush1.msra.mxu0 0.0
      %890 = vmatprep.subr.mxu0 0.0
      %891 = vmatpush1.msra.mxu0 0.0
      %892 = vmatprep.subr.mxu0 0.0
      %893 = vmatpush1.msra.mxu0 0.0
      %894 = vmatprep.subr.mxu0 0.0
      %895 = vmatpush1.msra.mxu0 0.0
      %896 = vmatprep.subr.mxu0 0.0
      %897 = vmatpush1.msra.mxu0 0.0
      %898 = vmatprep.subr.mxu0 0.0
      %899 = vmatpush1.msra.mxu0 0.0
      %900 = vmatprep.subr.mxu0 0.0
      %901 = vmatpush1.msra.mxu0 0.0
      %902 = vmatprep.subr.mxu0 0.0
      %903 = vmatpush1.msra.mxu0 0.0
      %904 = vmatprep.mubr.f32.mxu0 0.0
      %905 = vmatmul.mubr.f32.gmra.mrb[0].mxu0 %v835
      %v906 = vpop.f32.mrb[0].mxu0
      %v907 = vadd.f32 0.0, %v906
      %v908 = vpop.f32.mrb[0].mxu0
      %909 = vmatprep.mubr.f32.mxu0 0.0
      %910 = vmatmul.mubr.f32.gmra.mrb[0].mxu0 %v838
      %v911 = vpop.f32.mrb[0].mxu0
      %v912 = vadd.f32 0.0, %v911
      %v913 = vpop.f32.mrb[0].mxu0
      %914 = vdwg.mxu0
      %v916 = vsel %vm347, %v313, 0
      %v919 = vsel %vm347, %v314, 0
      %921 = vmatprep.subr.mxu0 0.0
      %922 = vmatpush1.msra.mxu0 %v338
      %923 = vmatprep.subr.mxu0 0.0
      %924 = vmatpush1.msra.mxu0 0.0
      %925 = vmatprep.subr.mxu0 0.0
      %926 = vmatpush1.msra.mxu0 0.0
      %927 = vmatprep.subr.mxu0 0.0
      %928 = vmatpush1.msra.mxu0 0.0
      %929 = vmatprep.subr.mxu0 0.0
      %930 = vmatpush1.msra.mxu0 0.0
      %931 = vmatprep.subr.mxu0 0.0
      %932 = vmatpush1.msra.mxu0 0.0
      %933 = vmatprep.subr.mxu0 0.0
      %934 = vmatpush1.msra.mxu0 0.0
      %935 = vmatprep.subr.mxu0 0.0
      %936 = vmatpush1.msra.mxu0 0.0
      %937 = vmatprep.subr.mxu0 0.0
      %938 = vmatpush1.msra.mxu0 0.0
      %939 = vmatprep.subr.mxu0 0.0
      %940 = vmatpush1.msra.mxu0 0.0
      %941 = vmatprep.subr.mxu0 0.0
      %942 = vmatpush1.msra.mxu0 0.0
      %943 = vmatprep.subr.mxu0 0.0
      %944 = vmatpush1.msra.mxu0 0.0
      %945 = vmatprep.subr.mxu0 0.0
      %946 = vmatpush1.msra.mxu0 0.0
      %947 = vmatprep.subr.mxu0 0.0
      %948 = vmatpush1.msra.mxu0 0.0
      %949 = vmatprep.subr.mxu0 0.0
      %950 = vmatpush1.msra.mxu0 0.0
      %951 = vmatprep.subr.mxu0 0.0
      %952 = vmatpush1.msra.mxu0 0.0
      %953 = vmatprep.subr.mxu0 0.0
      %954 = vmatpush1.msra.mxu0 0.0
      %955 = vmatprep.subr.mxu0 0.0
      %956 = vmatpush1.msra.mxu0 0.0
      %957 = vmatprep.subr.mxu0 0.0
      %958 = vmatpush1.msra.mxu0 0.0
      %959 = vmatprep.subr.mxu0 0.0
      %960 = vmatpush1.msra.mxu0 0.0
      %961 = vmatprep.subr.mxu0 0.0
      %962 = vmatpush1.msra.mxu0 0.0
      %963 = vmatprep.subr.mxu0 0.0
      %964 = vmatpush1.msra.mxu0 0.0
      %965 = vmatprep.subr.mxu0 0.0
      %966 = vmatpush1.msra.mxu0 0.0
      %967 = vmatprep.subr.mxu0 0.0
      %968 = vmatpush1.msra.mxu0 0.0
      %969 = vmatprep.subr.mxu0 0.0
      %970 = vmatpush1.msra.mxu0 0.0
      %971 = vmatprep.subr.mxu0 0.0
      %972 = vmatpush1.msra.mxu0 0.0
      %973 = vmatprep.subr.mxu0 0.0
      %974 = vmatpush1.msra.mxu0 0.0
      %975 = vmatprep.subr.mxu0 0.0
      %976 = vmatpush1.msra.mxu0 0.0
      %977 = vmatprep.subr.mxu0 0.0
      %978 = vmatpush1.msra.mxu0 0.0
      %979 = vmatprep.subr.mxu0 0.0
      %980 = vmatpush1.msra.mxu0 0.0
      %981 = vmatprep.subr.mxu0 0.0
      %982 = vmatpush1.msra.mxu0 0.0
      %983 = vmatprep.subr.mxu0 0.0
      %984 = vmatpush1.msra.mxu0 0.0
      %985 = vmatprep.mubr.f32.mxu0 0.0
      %986 = vmatmul.mubr.f32.gmra.mrb[0].mxu0 %v916
      %v987 = vpop.f32.mrb[0].mxu0
      %v988 = vadd.f32 0.0, %v987
      %v989 = vpop.f32.mrb[0].mxu0
      %990 = vmatprep.mubr.f32.mxu0 0.0
      %991 = vmatmul.mubr.f32.gmra.mrb[0].mxu0 %v919
      %v992 = vpop.f32.mrb[0].mxu0
      %v993 = vadd.f32 0.0, %v992
      %v994 = vpop.f32.mrb[0].mxu0
      %995 = vdwg.mxu0
      %v997 = vsel %vm347, %v315, 0
      %v1000 = vsel %vm347, %v316, 0
      %1002 = vmatprep.subr.mxu0 0.0
      %1003 = vmatpush1.msra.mxu0 %v339
      %1004 = vmatprep.subr.mxu0 0.0
      %1005 = vmatpush1.msra.mxu0 0.0
      %1006 = vmatprep.subr.mxu0 0.0
      %1007 = vmatpush1.msra.mxu0 0.0
      %1008 = vmatprep.subr.mxu0 0.0
      %1009 = vmatpush1.msra.mxu0 0.0
      %1010 = vmatprep.subr.mxu0 0.0
      %1011 = vmatpush1.msra.mxu0 0.0
      %1012 = vmatprep.subr.mxu0 0.0
      %1013 = vmatpush1.msra.mxu0 0.0
      %1014 = vmatprep.subr.mxu0 0.0
      %1015 = vmatpush1.msra.mxu0 0.0
      %1016 = vmatprep.subr.mxu0 0.0
      %1017 = vmatpush1.msra.mxu0 0.0
      %1018 = vmatprep.subr.mxu0 0.0
      %1019 = vmatpush1.msra.mxu0 0.0
      %1020 = vmatprep.subr.mxu0 0.0
      %1021 = vmatpush1.msra.mxu0 0.0
      %1022 = vmatprep.subr.mxu0 0.0
      %1023 = vmatpush1.msra.mxu0 0.0
      %1024 = vmatprep.subr.mxu0 0.0
      %1025 = vmatpush1.msra.mxu0 0.0
      %1026 = vmatprep.subr.mxu0 0.0
      %1027 = vmatpush1.msra.mxu0 0.0
      %1028 = vmatprep.subr.mxu0 0.0
      %1029 = vmatpush1.msra.mxu0 0.0
      %1030 = vmatprep.subr.mxu0 0.0
      %1031 = vmatpush1.msra.mxu0 0.0
      %1032 = vmatprep.subr.mxu0 0.0
      %1033 = vmatpush1.msra.mxu0 0.0
      %1034 = vmatprep.subr.mxu0 0.0
      %1035 = vmatpush1.msra.mxu0 0.0
      %1036 = vmatprep.subr.mxu0 0.0
      %1037 = vmatpush1.msra.mxu0 0.0
      %1038 = vmatprep.subr.mxu0 0.0
      %1039 = vmatpush1.msra.mxu0 0.0
      %1040 = vmatprep.subr.mxu0 0.0
      %1041 = vmatpush1.msra.mxu0 0.0
      %1042 = vmatprep.subr.mxu0 0.0
      %1043 = vmatpush1.msra.mxu0 0.0
      %1044 = vmatprep.subr.mxu0 0.0
      %1045 = vmatpush1.msra.mxu0 0.0
      %1046 = vmatprep.subr.mxu0 0.0
      %1047 = vmatpush1.msra.mxu0 0.0
      %1048 = vmatprep.subr.mxu0 0.0
      %1049 = vmatpush1.msra.mxu0 0.0
      %1050 = vmatprep.subr.mxu0 0.0
      %1051 = vmatpush1.msra.mxu0 0.0
      %1052 = vmatprep.subr.mxu0 0.0
      %1053 = vmatpush1.msra.mxu0 0.0
      %1054 = vmatprep.subr.mxu0 0.0
      %1055 = vmatpush1.msra.mxu0 0.0
      %1056 = vmatprep.subr.mxu0 0.0
      %1057 = vmatpush1.msra.mxu0 0.0
      %1058 = vmatprep.subr.mxu0 0.0
      %1059 = vmatpush1.msra.mxu0 0.0
      %1060 = vmatprep.subr.mxu0 0.0
      %1061 = vmatpush1.msra.mxu0 0.0
      %1062 = vmatprep.subr.mxu0 0.0
      %1063 = vmatpush1.msra.mxu0 0.0
      %1064 = vmatprep.subr.mxu0 0.0
      %1065 = vmatpush1.msra.mxu0 0.0
      %1066 = vmatprep.mubr.f32.mxu0 0.0
      %1067 = vmatmul.mubr.f32.gmra.mrb[0].mxu0 %v997
      %v1068 = vpop.f32.mrb[0].mxu0
      %v1069 = vadd.f32 0.0, %v1068
      %v1070 = vpop.f32.mrb[0].mxu0
      %1071 = vmatprep.mubr.f32.mxu0 0.0
      %1072 = vmatmul.mubr.f32.gmra.mrb[0].mxu0 %v1000
      %v1073 = vpop.f32.mrb[0].mxu0
      %v1074 = vadd.f32 0.0, %v1073
      %v1075 = vpop.f32.mrb[0].mxu0
      %1076 = vdwg.mxu0
      %v1078 = vsel %vm347, %v317, 0
      %v1081 = vsel %vm347, %v318, 0
      %1083 = vmatprep.subr.mxu0 0.0
      %1084 = vmatpush1.msra.mxu0 %v340
      %1085 = vmatprep.subr.mxu0 0.0
      %1086 = vmatpush1.msra.mxu0 0.0
      %1087 = vmatprep.subr.mxu0 0.0
      %1088 = vmatpush1.msra.mxu0 0.0
      %1089 = vmatprep.subr.mxu0 0.0
      %1090 = vmatpush1.msra.mxu0 0.0
      %1091 = vmatprep.subr.mxu0 0.0
      %1092 = vmatpush1.msra.mxu0 0.0
      %1093 = vmatprep.subr.mxu0 0.0
      %1094 = vmatpush1.msra.mxu0 0.0
      %1095 = vmatprep.subr.mxu0 0.0
      %1096 = vmatpush1.msra.mxu0 0.0
      %1097 = vmatprep.subr.mxu0 0.0
      %1098 = vmatpush1.msra.mxu0 0.0
      %1099 = vmatprep.subr.mxu0 0.0
      %1100 = vmatpush1.msra.mxu0 0.0
      %1101 = vmatprep.subr.mxu0 0.0
      %1102 = vmatpush1.msra.mxu0 0.0
      %1103 = vmatprep.subr.mxu0 0.0
      %1104 = vmatpush1.msra.mxu0 0.0
      %1105 = vmatprep.subr.mxu0 0.0
      %1106 = vmatpush1.msra.mxu0 0.0
      %1107 = vmatprep.subr.mxu0 0.0
      %1108 = vmatpush1.msra.mxu0 0.0
      %1109 = vmatprep.subr.mxu0 0.0
      %1110 = vmatpush1.msra.mxu0 0.0
      %1111 = vmatprep.subr.mxu0 0.0
      %1112 = vmatpush1.msra.mxu0 0.0
      %1113 = vmatprep.subr.mxu0 0.0
      %1114 = vmatpush1.msra.mxu0 0.0
      %1115 = vmatprep.subr.mxu0 0.0
      %1116 = vmatpush1.msra.mxu0 0.0
      %1117 = vmatprep.subr.mxu0 0.0
      %1118 = vmatpush1.msra.mxu0 0.0
      %1119 = vmatprep.subr.mxu0 0.0
      %1120 = vmatpush1.msra.mxu0 0.0
      %1121 = vmatprep.subr.mxu0 0.0
      %1122 = vmatpush1.msra.mxu0 0.0
      %1123 = vmatprep.subr.mxu0 0.0
      %1124 = vmatpush1.msra.mxu0 0.0
      %1125 = vmatprep.subr.mxu0 0.0
      %1126 = vmatpush1.msra.mxu0 0.0
      %1127 = vmatprep.subr.mxu0 0.0
      %1128 = vmatpush1.msra.mxu0 0.0
      %1129 = vmatprep.subr.mxu0 0.0
      %1130 = vmatpush1.msra.mxu0 0.0
      %1131 = vmatprep.subr.mxu0 0.0
      %1132 = vmatpush1.msra.mxu0 0.0
      %1133 = vmatprep.subr.mxu0 0.0
      %1134 = vmatpush1.msra.mxu0 0.0
      %1135 = vmatprep.subr.mxu0 0.0
      %1136 = vmatpush1.msra.mxu0 0.0
      %1137 = vmatprep.subr.mxu0 0.0
      %1138 = vmatpush1.msra.mxu0 0.0
      %1139 = vmatprep.subr.mxu0 0.0
      %1140 = vmatpush1.msra.mxu0 0.0
      %1141 = vmatprep.subr.mxu0 0.0
      %1142 = vmatpush1.msra.mxu0 0.0
      %1143 = vmatprep.subr.mxu0 0.0
      %1144 = vmatpush1.msra.mxu0 0.0
      %1145 = vmatprep.subr.mxu0 0.0
      %1146 = vmatpush1.msra.mxu0 0.0
      %1147 = vmatprep.mubr.f32.mxu0 0.0
      %1148 = vmatmul.mubr.f32.gmra.mrb[0].mxu0 %v1078
      %v1149 = vpop.f32.mrb[0].mxu0
      %v1150 = vadd.f32 0.0, %v1149
      %v1151 = vpop.f32.mrb[0].mxu0
      %1152 = vmatprep.mubr.f32.mxu0 0.0
      %1153 = vmatmul.mubr.f32.gmra.mrb[0].mxu0 %v1081
      %v1154 = vpop.f32.mrb[0].mxu0
      %v1155 = vadd.f32 0.0, %v1154
      %v1156 = vpop.f32.mrb[0].mxu0
      %1157 = vdwg.mxu0
      %v1159 = vsel %vm347, %v319, 0
      %v1162 = vsel %vm347, %v320, 0
      %1164 = vmatprep.subr.mxu0 0.0
      %1165 = vmatpush1.msra.mxu0 %v341
      %1166 = vmatprep.subr.mxu0 0.0
      %1167 = vmatpush1.msra.mxu0 0.0
      %1168 = vmatprep.subr.mxu0 0.0
      %1169 = vmatpush1.msra.mxu0 0.0
      %1170 = vmatprep.subr.mxu0 0.0
      %1171 = vmatpush1.msra.mxu0 0.0
      %1172 = vmatprep.subr.mxu0 0.0
      %1173 = vmatpush1.msra.mxu0 0.0
      %1174 = vmatprep.subr.mxu0 0.0
      %1175 = vmatpush1.msra.mxu0 0.0
      %1176 = vmatprep.subr.mxu0 0.0
      %1177 = vmatpush1.msra.mxu0 0.0
      %1178 = vmatprep.subr.mxu0 0.0
      %1179 = vmatpush1.msra.mxu0 0.0
      %1180 = vmatprep.subr.mxu0 0.0
      %1181 = vmatpush1.msra.mxu0 0.0
      %1182 = vmatprep.subr.mxu0 0.0
      %1183 = vmatpush1.msra.mxu0 0.0
      %1184 = vmatprep.subr.mxu0 0.0
      %1185 = vmatpush1.msra.mxu0 0.0
      %1186 = vmatprep.subr.mxu0 0.0
      %1187 = vmatpush1.msra.mxu0 0.0
      %1188 = vmatprep.subr.mxu0 0.0
      %1189 = vmatpush1.msra.mxu0 0.0
      %1190 = vmatprep.subr.mxu0 0.0
      %1191 = vmatpush1.msra.mxu0 0.0
      %1192 = vmatprep.subr.mxu0 0.0
      %1193 = vmatpush1.msra.mxu0 0.0
      %1194 = vmatprep.subr.mxu0 0.0
      %1195 = vmatpush1.msra.mxu0 0.0
      %1196 = vmatprep.subr.mxu0 0.0
      %1197 = vmatpush1.msra.mxu0 0.0
      %1198 = vmatprep.subr.mxu0 0.0
      %1199 = vmatpush1.msra.mxu0 0.0
      %1200 = vmatprep.subr.mxu0 0.0
      %1201 = vmatpush1.msra.mxu0 0.0
      %1202 = vmatprep.subr.mxu0 0.0
      %1203 = vmatpush1.msra.mxu0 0.0
      %1204 = vmatprep.subr.mxu0 0.0
      %1205 = vmatpush1.msra.mxu0 0.0
      %1206 = vmatprep.subr.mxu0 0.0
      %1207 = vmatpush1.msra.mxu0 0.0
      %1208 = vmatprep.subr.mxu0 0.0
      %1209 = vmatpush1.msra.mxu0 0.0
      %1210 = vmatprep.subr.mxu0 0.0
      %1211 = vmatpush1.msra.mxu0 0.0
      %1212 = vmatprep.subr.mxu0 0.0
      %1213 = vmatpush1.msra.mxu0 0.0
      %1214 = vmatprep.subr.mxu0 0.0
      %1215 = vmatpush1.msra.mxu0 0.0
      %1216 = vmatprep.subr.mxu0 0.0
      %1217 = vmatpush1.msra.mxu0 0.0
      %1218 = vmatprep.subr.mxu0 0.0
      %1219 = vmatpush1.msra.mxu0 0.0
      %1220 = vmatprep.subr.mxu0 0.0
      %1221 = vmatpush1.msra.mxu0 0.0
      %1222 = vmatprep.subr.mxu0 0.0
      %1223 = vmatpush1.msra.mxu0 0.0
      %1224 = vmatprep.subr.mxu0 0.0
      %1225 = vmatpush1.msra.mxu0 0.0
      %1226 = vmatprep.subr.mxu0 0.0
      %1227 = vmatpush1.msra.mxu0 0.0
      %1228 = vmatprep.mubr.f32.mxu0 0.0
      %1229 = vmatmul.mubr.f32.gmra.mrb[0].mxu0 %v1159
      %v1230 = vpop.f32.mrb[0].mxu0
      %v1231 = vadd.f32 0.0, %v1230
      %v1232 = vpop.f32.mrb[0].mxu0
      %1233 = vmatprep.mubr.f32.mxu0 0.0
      %1234 = vmatmul.mubr.f32.gmra.mrb[0].mxu0 %v1162
      %v1235 = vpop.f32.mrb[0].mxu0
      %v1236 = vadd.f32 0.0, %v1235
      %v1237 = vpop.f32.mrb[0].mxu0
      %1238 = vdwg.mxu0
      %v1240 = vsel %vm347, %v321, 0
      %v1243 = vsel %vm347, %v322, 0
      %1245 = vmatprep.subr.mxu0 0.0
      %1246 = vmatpush1.msra.mxu0 %v342
      %1247 = vmatprep.subr.mxu0 0.0
      %1248 = vmatpush1.msra.mxu0 0.0
      %1249 = vmatprep.subr.mxu0 0.0
      %1250 = vmatpush1.msra.mxu0 0.0
      %1251 = vmatprep.subr.mxu0 0.0
      %1252 = vmatpush1.msra.mxu0 0.0
      %1253 = vmatprep.subr.mxu0 0.0
      %1254 = vmatpush1.msra.mxu0 0.0
      %1255 = vmatprep.subr.mxu0 0.0
      %1256 = vmatpush1.msra.mxu0 0.0
      %1257 = vmatprep.subr.mxu0 0.0
      %1258 = vmatpush1.msra.mxu0 0.0
      %1259 = vmatprep.subr.mxu0 0.0
      %1260 = vmatpush1.msra.mxu0 0.0
      %1261 = vmatprep.subr.mxu0 0.0
      %1262 = vmatpush1.msra.mxu0 0.0
      %1263 = vmatprep.subr.mxu0 0.0
      %1264 = vmatpush1.msra.mxu0 0.0
      %1265 = vmatprep.subr.mxu0 0.0
      %1266 = vmatpush1.msra.mxu0 0.0
      %1267 = vmatprep.subr.mxu0 0.0
      %1268 = vmatpush1.msra.mxu0 0.0
      %1269 = vmatprep.subr.mxu0 0.0
      %1270 = vmatpush1.msra.mxu0 0.0
      %1271 = vmatprep.subr.mxu0 0.0
      %1272 = vmatpush1.msra.mxu0 0.0
      %1273 = vmatprep.subr.mxu0 0.0
      %1274 = vmatpush1.msra.mxu0 0.0
      %1275 = vmatprep.subr.mxu0 0.0
      %1276 = vmatpush1.msra.mxu0 0.0
      %1277 = vmatprep.subr.mxu0 0.0
      %1278 = vmatpush1.msra.mxu0 0.0
      %1279 = vmatprep.subr.mxu0 0.0
      %1280 = vmatpush1.msra.mxu0 0.0
      %1281 = vmatprep.subr.mxu0 0.0
      %1282 = vmatpush1.msra.mxu0 0.0
      %1283 = vmatprep.subr.mxu0 0.0
      %1284 = vmatpush1.msra.mxu0 0.0
      %1285 = vmatprep.subr.mxu0 0.0
      %1286 = vmatpush1.msra.mxu0 0.0
      %1287 = vmatprep.subr.mxu0 0.0
      %1288 = vmatpush1.msra.mxu0 0.0
      %1289 = vmatprep.subr.mxu0 0.0
      %1290 = vmatpush1.msra.mxu0 0.0
      %1291 = vmatprep.subr.mxu0 0.0
      %1292 = vmatpush1.msra.mxu0 0.0
      %1293 = vmatprep.subr.mxu0 0.0
      %1294 = vmatpush1.msra.mxu0 0.0
      %1295 = vmatprep.subr.mxu0 0.0
      %1296 = vmatpush1.msra.mxu0 0.0
      %1297 = vmatprep.subr.mxu0 0.0
      %1298 = vmatpush1.msra.mxu0 0.0
      %1299 = vmatprep.subr.mxu0 0.0
      %1300 = vmatpush1.msra.mxu0 0.0
      %1301 = vmatprep.subr.mxu0 0.0
      %1302 = vmatpush1.msra.mxu0 0.0
      %1303 = vmatprep.subr.mxu0 0.0
      %1304 = vmatpush1.msra.mxu0 0.0
      %1305 = vmatprep.subr.mxu0 0.0
      %1306 = vmatpush1.msra.mxu0 0.0
      %1307 = vmatprep.subr.mxu0 0.0
      %1308 = vmatpush1.msra.mxu0 0.0
      %1309 = vmatprep.mubr.f32.mxu0 0.0
      %1310 = vmatmul.mubr.f32.gmra.mrb[0].mxu0 %v1240
      %v1311 = vpop.f32.mrb[0].mxu0
      %v1312 = vadd.f32 0.0, %v1311
      %v1313 = vpop.f32.mrb[0].mxu0
      %1314 = vmatprep.mubr.f32.mxu0 0.0
      %1315 = vmatmul.mubr.f32.gmra.mrb[0].mxu0 %v1243
      %v1316 = vpop.f32.mrb[0].mxu0
      %v1317 = vadd.f32 0.0, %v1316
      %v1318 = vpop.f32.mrb[0].mxu0
      %1319 = vdwg.mxu0
      %v1321 = vsel %vm347, %v323, 0
      %v1324 = vsel %vm347, %v324, 0
      %1326 = vmatprep.subr.mxu0 0.0
      %1327 = vmatpush1.msra.mxu0 %v343
      %1328 = vmatprep.subr.mxu0 0.0
      %1329 = vmatpush1.msra.mxu0 0.0
      %1330 = vmatprep.subr.mxu0 0.0
      %1331 = vmatpush1.msra.mxu0 0.0
      %1332 = vmatprep.subr.mxu0 0.0
      %1333 = vmatpush1.msra.mxu0 0.0
      %1334 = vmatprep.subr.mxu0 0.0
      %1335 = vmatpush1.msra.mxu0 0.0
      %1336 = vmatprep.subr.mxu0 0.0
      %1337 = vmatpush1.msra.mxu0 0.0
      %1338 = vmatprep.subr.mxu0 0.0
      %1339 = vmatpush1.msra.mxu0 0.0
      %1340 = vmatprep.subr.mxu0 0.0
      %1341 = vmatpush1.msra.mxu0 0.0
      %1342 = vmatprep.subr.mxu0 0.0
      %1343 = vmatpush1.msra.mxu0 0.0
      %1344 = vmatprep.subr.mxu0 0.0
      %1345 = vmatpush1.msra.mxu0 0.0
      %1346 = vmatprep.subr.mxu0 0.0
      %1347 = vmatpush1.msra.mxu0 0.0
      %1348 = vmatprep.subr.mxu0 0.0
      %1349 = vmatpush1.msra.mxu0 0.0
      %1350 = vmatprep.subr.mxu0 0.0
      %1351 = vmatpush1.msra.mxu0 0.0
      %1352 = vmatprep.subr.mxu0 0.0
      %1353 = vmatpush1.msra.mxu0 0.0
      %1354 = vmatprep.subr.mxu0 0.0
      %1355 = vmatpush1.msra.mxu0 0.0
      %1356 = vmatprep.subr.mxu0 0.0
      %1357 = vmatpush1.msra.mxu0 0.0
      %1358 = vmatprep.subr.mxu0 0.0
      %1359 = vmatpush1.msra.mxu0 0.0
      %1360 = vmatprep.subr.mxu0 0.0
      %1361 = vmatpush1.msra.mxu0 0.0
      %1362 = vmatprep.subr.mxu0 0.0
      %1363 = vmatpush1.msra.mxu0 0.0
      %1364 = vmatprep.subr.mxu0 0.0
      %1365 = vmatpush1.msra.mxu0 0.0
      %1366 = vmatprep.subr.mxu0 0.0
      %1367 = vmatpush1.msra.mxu0 0.0
      %1368 = vmatprep.subr.mxu0 0.0
      %1369 = vmatpush1.msra.mxu0 0.0
      %1370 = vmatprep.subr.mxu0 0.0
      %1371 = vmatpush1.msra.mxu0 0.0
      %1372 = vmatprep.subr.mxu0 0.0
      %1373 = vmatpush1.msra.mxu0 0.0
      %1374 = vmatprep.subr.mxu0 0.0
      %1375 = vmatpush1.msra.mxu0 0.0
      %1376 = vmatprep.subr.mxu0 0.0
      %1377 = vmatpush1.msra.mxu0 0.0
      %1378 = vmatprep.subr.mxu0 0.0
      %1379 = vmatpush1.msra.mxu0 0.0
      %1380 = vmatprep.subr.mxu0 0.0
      %1381 = vmatpush1.msra.mxu0 0.0
      %1382 = vmatprep.subr.mxu0 0.0
      %1383 = vmatpush1.msra.mxu0 0.0
      %1384 = vmatprep.subr.mxu0 0.0
      %1385 = vmatpush1.msra.mxu0 0.0
      %1386 = vmatprep.subr.mxu0 0.0
      %1387 = vmatpush1.msra.mxu0 0.0
      %1388 = vmatprep.subr.mxu0 0.0
      %1389 = vmatpush1.msra.mxu0 0.0
      %1390 = vmatprep.mubr.f32.mxu0 0.0
      %1391 = vmatmul.mubr.f32.gmra.mrb[0].mxu0 %v1321
      %v1392 = vpop.f32.mrb[0].mxu0
      %v1393 = vadd.f32 0.0, %v1392
      %v1394 = vpop.f32.mrb[0].mxu0
      %1395 = vmatprep.mubr.f32.mxu0 0.0
      %1396 = vmatmul.mubr.f32.gmra.mrb[0].mxu0 %v1324
      %v1397 = vpop.f32.mrb[0].mxu0
      %v1398 = vadd.f32 0.0, %v1397
      %v1399 = vpop.f32.mrb[0].mxu0
      %1400 = vdwg.mxu0
      %v1402 = vsel %vm347, %v325, 0
      %v1405 = vsel %vm347, %v326, 0
      %1407 = vmatprep.subr.mxu0 0.0
      %1408 = vmatpush1.msra.mxu0 %v344
      %1409 = vmatprep.subr.mxu0 0.0
      %1410 = vmatpush1.msra.mxu0 0.0
      %1411 = vmatprep.subr.mxu0 0.0
      %1412 = vmatpush1.msra.mxu0 0.0
      %1413 = vmatprep.subr.mxu0 0.0
      %1414 = vmatpush1.msra.mxu0 0.0
      %1415 = vmatprep.subr.mxu0 0.0
      %1416 = vmatpush1.msra.mxu0 0.0
      %1417 = vmatprep.subr.mxu0 0.0
      %1418 = vmatpush1.msra.mxu0 0.0
      %1419 = vmatprep.subr.mxu0 0.0
      %1420 = vmatpush1.msra.mxu0 0.0
      %1421 = vmatprep.subr.mxu0 0.0
      %1422 = vmatpush1.msra.mxu0 0.0
      %1423 = vmatprep.subr.mxu0 0.0
      %1424 = vmatpush1.msra.mxu0 0.0
      %1425 = vmatprep.subr.mxu0 0.0
      %1426 = vmatpush1.msra.mxu0 0.0
      %1427 = vmatprep.subr.mxu0 0.0
      %1428 = vmatpush1.msra.mxu0 0.0
      %1429 = vmatprep.subr.mxu0 0.0
      %1430 = vmatpush1.msra.mxu0 0.0
      %1431 = vmatprep.subr.mxu0 0.0
      %1432 = vmatpush1.msra.mxu0 0.0
      %1433 = vmatprep.subr.mxu0 0.0
      %1434 = vmatpush1.msra.mxu0 0.0
      %1435 = vmatprep.subr.mxu0 0.0
      %1436 = vmatpush1.msra.mxu0 0.0
      %1437 = vmatprep.subr.mxu0 0.0
      %1438 = vmatpush1.msra.mxu0 0.0
      %1439 = vmatprep.subr.mxu0 0.0
      %1440 = vmatpush1.msra.mxu0 0.0
      %1441 = vmatprep.subr.mxu0 0.0
      %1442 = vmatpush1.msra.mxu0 0.0
      %1443 = vmatprep.subr.mxu0 0.0
      %1444 = vmatpush1.msra.mxu0 0.0
      %1445 = vmatprep.subr.mxu0 0.0
      %1446 = vmatpush1.msra.mxu0 0.0
      %1447 = vmatprep.subr.mxu0 0.0
      %1448 = vmatpush1.msra.mxu0 0.0
      %1449 = vmatprep.subr.mxu0 0.0
      %1450 = vmatpush1.msra.mxu0 0.0
      %1451 = vmatprep.subr.mxu0 0.0
      %1452 = vmatpush1.msra.mxu0 0.0
      %1453 = vmatprep.subr.mxu0 0.0
      %1454 = vmatpush1.msra.mxu0 0.0
      %1455 = vmatprep.subr.mxu0 0.0
      %1456 = vmatpush1.msra.mxu0 0.0
      %1457 = vmatprep.subr.mxu0 0.0
      %1458 = vmatpush1.msra.mxu0 0.0
      %1459 = vmatprep.subr.mxu0 0.0
      %1460 = vmatpush1.msra.mxu0 0.0
      %1461 = vmatprep.subr.mxu0 0.0
      %1462 = vmatpush1.msra.mxu0 0.0
      %1463 = vmatprep.subr.mxu0 0.0
      %1464 = vmatpush1.msra.mxu0 0.0
      %1465 = vmatprep.subr.mxu0 0.0
      %1466 = vmatpush1.msra.mxu0 0.0
      %1467 = vmatprep.subr.mxu0 0.0
      %1468 = vmatpush1.msra.mxu0 0.0
      %1469 = vmatprep.subr.mxu0 0.0
      %1470 = vmatpush1.msra.mxu0 0.0
      %1471 = vmatprep.mubr.f32.mxu0 0.0
      %1472 = vmatmul.mubr.f32.gmra.mrb[0].mxu0 %v1402
      %v1473 = vpop.f32.mrb[0].mxu0
      %v1474 = vadd.f32 0.0, %v1473
      %v1475 = vpop.f32.mrb[0].mxu0
      %1476 = vmatprep.mubr.f32.mxu0 0.0
      %1477 = vmatmul.mubr.f32.gmra.mrb[0].mxu0 %v1405
      %v1478 = vpop.f32.mrb[0].mxu0
      %v1479 = vadd.f32 0.0, %v1478
      %v1480 = vpop.f32.mrb[0].mxu0
      %1481 = vdwg.mxu0
      %v1483 = vsel %vm347, %v327, 0
      %v1486 = vsel %vm347, %v328, 0
      %1488 = vmatprep.subr.mxu0 0.0
      %1489 = vmatpush1.msra.mxu0 %v345
      %1490 = vmatprep.subr.mxu0 0.0
      %1491 = vmatpush1.msra.mxu0 0.0
      %1492 = vmatprep.subr.mxu0 0.0
      %1493 = vmatpush1.msra.mxu0 0.0
      %1494 = vmatprep.subr.mxu0 0.0
      %1495 = vmatpush1.msra.mxu0 0.0
      %1496 = vmatprep.subr.mxu0 0.0
      %1497 = vmatpush1.msra.mxu0 0.0
      %1498 = vmatprep.subr.mxu0 0.0
      %1499 = vmatpush1.msra.mxu0 0.0
      %1500 = vmatprep.subr.mxu0 0.0
      %1501 = vmatpush1.msra.mxu0 0.0
      %1502 = vmatprep.subr.mxu0 0.0
      %1503 = vmatpush1.msra.mxu0 0.0
      %1504 = vmatprep.subr.mxu0 0.0
      %1505 = vmatpush1.msra.mxu0 0.0
      %1506 = vmatprep.subr.mxu0 0.0
      %1507 = vmatpush1.msra.mxu0 0.0
      %1508 = vmatprep.subr.mxu0 0.0
      %1509 = vmatpush1.msra.mxu0 0.0
      %1510 = vmatprep.subr.mxu0 0.0
      %1511 = vmatpush1.msra.mxu0 0.0
      %1512 = vmatprep.subr.mxu0 0.0
      %1513 = vmatpush1.msra.mxu0 0.0
      %1514 = vmatprep.subr.mxu0 0.0
      %1515 = vmatpush1.msra.mxu0 0.0
      %1516 = vmatprep.subr.mxu0 0.0
      %1517 = vmatpush1.msra.mxu0 0.0
      %1518 = vmatprep.subr.mxu0 0.0
      %1519 = vmatpush1.msra.mxu0 0.0
      %1520 = vmatprep.subr.mxu0 0.0
      %1521 = vmatpush1.msra.mxu0 0.0
      %1522 = vmatprep.subr.mxu0 0.0
      %1523 = vmatpush1.msra.mxu0 0.0
      %1524 = vmatprep.subr.mxu0 0.0
      %1525 = vmatpush1.msra.mxu0 0.0
      %1526 = vmatprep.subr.mxu0 0.0
      %1527 = vmatpush1.msra.mxu0 0.0
      %1528 = vmatprep.subr.mxu0 0.0
      %1529 = vmatpush1.msra.mxu0 0.0
      %1530 = vmatprep.subr.mxu0 0.0
      %1531 = vmatpush1.msra.mxu0 0.0
      %1532 = vmatprep.subr.mxu0 0.0
      %1533 = vmatpush1.msra.mxu0 0.0
      %1534 = vmatprep.subr.mxu0 0.0
      %1535 = vmatpush1.msra.mxu0 0.0
      %1536 = vmatprep.subr.mxu0 0.0
      %1537 = vmatpush1.msra.mxu0 0.0
      %1538 = vmatprep.subr.mxu0 0.0
      %1539 = vmatpush1.msra.mxu0 0.0
      %1540 = vmatprep.subr.mxu0 0.0
      %1541 = vmatpush1.msra.mxu0 0.0
      %1542 = vmatprep.subr.mxu0 0.0
      %1543 = vmatpush1.msra.mxu0 0.0
      %1544 = vmatprep.subr.mxu0 0.0
      %1545 = vmatpush1.msra.mxu0 0.0
      %1546 = vmatprep.subr.mxu0 0.0
      %1547 = vmatpush1.msra.mxu0 0.0
      %1548 = vmatprep.subr.mxu0 0.0
      %1549 = vmatpush1.msra.mxu0 0.0
      %1550 = vmatprep.subr.mxu0 0.0
      %1551 = vmatpush1.msra.mxu0 0.0
      %1552 = vmatprep.mubr.f32.mxu0 0.0
      %1553 = vmatmul.mubr.f32.gmra.mrb[0].mxu0 %v1483
      %v1554 = vpop.f32.mrb[0].mxu0
      %v1555 = vadd.f32 0.0, %v1554
      %v1556 = vpop.f32.mrb[0].mxu0
      %1557 = vmatprep.mubr.f32.mxu0 0.0
      %1558 = vmatmul.mubr.f32.gmra.mrb[0].mxu0 %v1486
      %v1559 = vpop.f32.mrb[0].mxu0
      %v1560 = vadd.f32 0.0, %v1559
      %v1561 = vpop.f32.mrb[0].mxu0
      %1562 = vdwg.mxu0
      %v1564 = vsel %vm347, %v329, 0
      %v1567 = vsel %vm347, %v330, 0
      %1569 = vmatprep.subr.mxu0 0.0
      %1570 = vmatpush1.msra.mxu0 %v346
      %1571 = vmatprep.subr.mxu0 0.0
      %1572 = vmatpush1.msra.mxu0 0.0
      %1573 = vmatprep.subr.mxu0 0.0
      %1574 = vmatpush1.msra.mxu0 0.0
      %1575 = vmatprep.subr.mxu0 0.0
      %1576 = vmatpush1.msra.mxu0 0.0
      %1577 = vmatprep.subr.mxu0 0.0
      %1578 = vmatpush1.msra.mxu0 0.0
      %1579 = vmatprep.subr.mxu0 0.0
      %1580 = vmatpush1.msra.mxu0 0.0
      %1581 = vmatprep.subr.mxu0 0.0
      %1582 = vmatpush1.msra.mxu0 0.0
      %1583 = vmatprep.subr.mxu0 0.0
      %1584 = vmatpush1.msra.mxu0 0.0
      %1585 = vmatprep.subr.mxu0 0.0
      %1586 = vmatpush1.msra.mxu0 0.0
      %1587 = vmatprep.subr.mxu0 0.0
      %1588 = vmatpush1.msra.mxu0 0.0
      %1589 = vmatprep.subr.mxu0 0.0
      %1590 = vmatpush1.msra.mxu0 0.0
      %1591 = vmatprep.subr.mxu0 0.0
      %1592 = vmatpush1.msra.mxu0 0.0
      %1593 = vmatprep.subr.mxu0 0.0
      %1594 = vmatpush1.msra.mxu0 0.0
      %1595 = vmatprep.subr.mxu0 0.0
      %1596 = vmatpush1.msra.mxu0 0.0
      %1597 = vmatprep.subr.mxu0 0.0
      %1598 = vmatpush1.msra.mxu0 0.0
      %1599 = vmatprep.subr.mxu0 0.0
      %1600 = vmatpush1.msra.mxu0 0.0
      %1601 = vmatprep.subr.mxu0 0.0
      %1602 = vmatpush1.msra.mxu0 0.0
      %1603 = vmatprep.subr.mxu0 0.0
      %1604 = vmatpush1.msra.mxu0 0.0
      %1605 = vmatprep.subr.mxu0 0.0
      %1606 = vmatpush1.msra.mxu0 0.0
      %1607 = vmatprep.subr.mxu0 0.0
      %1608 = vmatpush1.msra.mxu0 0.0
      %1609 = vmatprep.subr.mxu0 0.0
      %1610 = vmatpush1.msra.mxu0 0.0
      %1611 = vmatprep.subr.mxu0 0.0
      %1612 = vmatpush1.msra.mxu0 0.0
      %1613 = vmatprep.subr.mxu0 0.0
      %1614 = vmatpush1.msra.mxu0 0.0
      %1615 = vmatprep.subr.mxu0 0.0
      %1616 = vmatpush1.msra.mxu0 0.0
      %1617 = vmatprep.subr.mxu0 0.0
      %1618 = vmatpush1.msra.mxu0 0.0
      %1619 = vmatprep.subr.mxu0 0.0
      %1620 = vmatpush1.msra.mxu0 0.0
      %1621 = vmatprep.subr.mxu0 0.0
      %1622 = vmatpush1.msra.mxu0 0.0
      %1623 = vmatprep.subr.mxu0 0.0
      %1624 = vmatpush1.msra.mxu0 0.0
      %1625 = vmatprep.subr.mxu0 0.0
      %1626 = vmatpush1.msra.mxu0 0.0
      %1627 = vmatprep.subr.mxu0 0.0
      %1628 = vmatpush1.msra.mxu0 0.0
      %1629 = vmatprep.subr.mxu0 0.0
      %1630 = vmatpush1.msra.mxu0 0.0
      %1631 = vmatprep.subr.mxu0 0.0
      %1632 = vmatpush1.msra.mxu0 0.0
      %1633 = vmatprep.mubr.f32.mxu0 0.0
      %1634 = vmatmul.mubr.f32.gmra.mrb[0].mxu0 %v1564
      %v1635 = vpop.f32.mrb[0].mxu0
      %v1636 = vadd.f32 0.0, %v1635
      %v1637 = vpop.f32.mrb[0].mxu0
      %1638 = vmatprep.mubr.f32.mxu0 0.0
      %1639 = vmatmul.mubr.f32.gmra.mrb[0].mxu0 %v1567
      %v1640 = vpop.f32.mrb[0].mxu0
      %v1641 = vadd.f32 0.0, %v1640
      %v1642 = vpop.f32.mrb[0].mxu0
      %1643 = vdwg.mxu0
      %v1644 = vld [vmem:[%s4] sm:$0x3]
      %v1645 = vld [vmem:[%s3] sm:$0xf]
      %vm1646 = vcmask 31744
      %v1648 = vsel %vm1646, %v421, 0
      %v1651 = vsel %vm1646, %v426, 0
      %v1654 = vsel %vm1646, %v502, 0
      %v1657 = vsel %vm1646, %v507, 0
      %v1660 = vsel %vm1646, %v583, 0
      %v1663 = vsel %vm1646, %v588, 0
      %v1666 = vsel %vm1646, %v664, 0
      %v1669 = vsel %vm1646, %v669, 0
      %v1672 = vsel %vm1646, %v745, 0
      %v1675 = vsel %vm1646, %v750, 0
      %v1678 = vsel %vm1646, %v826, 0
      %v1681 = vsel %vm1646, %v831, 0
      %v1684 = vsel %vm1646, %v907, 0
      %v1687 = vsel %vm1646, %v912, 0
      %v1690 = vsel %vm1646, %v988, 0
      %v1693 = vsel %vm1646, %v993, 0
      %v1696 = vsel %vm1646, %v1069, 0
      %v1699 = vsel %vm1646, %v1074, 0
      %v1702 = vsel %vm1646, %v1150, 0
      %v1705 = vsel %vm1646, %v1155, 0
      %v1708 = vsel %vm1646, %v1231, 0
      %v1711 = vsel %vm1646, %v1236, 0
      %v1714 = vsel %vm1646, %v1312, 0
      %v1717 = vsel %vm1646, %v1317, 0
      %v1720 = vsel %vm1646, %v1393, 0
      %v1723 = vsel %vm1646, %v1398, 0
      %v1726 = vsel %vm1646, %v1474, 0
      %v1729 = vsel %vm1646, %v1479, 0
      %v1732 = vsel %vm1646, %v1555, 0
      %v1735 = vsel %vm1646, %v1560, 0
      %v1738 = vsel %vm1646, %v1636, 0
      %v1741 = vsel %vm1646, %v1641, 0
      %vm1743 = vcmask 1043456
      %v1745 = vsel %vm1743, %v1645, 0
      %1747 = vmatprep.subr.mxu0 0.0
      %1748 = vmatpush1.msra.mxu0 %v1745
      %1749 = vmatprep.subr.mxu0 0.0
      %1750 = vmatpush1.msra.mxu0 0.0
      %1751 = vmatprep.subr.mxu0 0.0
      %1752 = vmatpush1.msra.mxu0 0.0
      %1753 = vmatprep.subr.mxu0 0.0
      %1754 = vmatpush1.msra.mxu0 0.0
      %1755 = vmatprep.subr.mxu0 0.0
      %1756 = vmatpush1.msra.mxu0 0.0
      %1757 = vmatprep.subr.mxu0 0.0
      %1758 = vmatpush1.msra.mxu0 0.0
      %1759 = vmatprep.subr.mxu0 0.0
      %1760 = vmatpush1.msra.mxu0 0.0
      %1761 = vmatprep.subr.mxu0 0.0
      %1762 = vmatpush1.msra.mxu0 0.0
      %1763 = vmatprep.subr.mxu0 0.0
      %1764 = vmatpush1.msra.mxu0 0.0
      %1765 = vmatprep.subr.mxu0 0.0
      %1766 = vmatpush1.msra.mxu0 0.0
      %1767 = vmatprep.subr.mxu0 0.0
      %1768 = vmatpush1.msra.mxu0 0.0
      %1769 = vmatprep.subr.mxu0 0.0
      %1770 = vmatpush1.msra.mxu0 0.0
      %1771 = vmatprep.subr.mxu0 0.0
      %1772 = vmatpush1.msra.mxu0 0.0
      %1773 = vmatprep.subr.mxu0 0.0
      %1774 = vmatpush1.msra.mxu0 0.0
      %1775 = vmatprep.subr.mxu0 0.0
      %1776 = vmatpush1.msra.mxu0 0.0
      %1777 = vmatprep.subr.mxu0 0.0
      %1778 = vmatpush1.msra.mxu0 0.0
      %1779 = vmatprep.subr.mxu0 0.0
      %1780 = vmatpush1.msra.mxu0 0.0
      %1781 = vmatprep.subr.mxu0 0.0
      %1782 = vmatpush1.msra.mxu0 0.0
      %1783 = vmatprep.subr.mxu0 0.0
      %1784 = vmatpush1.msra.mxu0 0.0
      %1785 = vmatprep.subr.mxu0 0.0
      %1786 = vmatpush1.msra.mxu0 0.0
      %1787 = vmatprep.subr.mxu0 0.0
      %1788 = vmatpush1.msra.mxu0 0.0
      %1789 = vmatprep.subr.mxu0 0.0
      %1790 = vmatpush1.msra.mxu0 0.0
      %1791 = vmatprep.subr.mxu0 0.0
      %1792 = vmatpush1.msra.mxu0 0.0
      %1793 = vmatprep.subr.mxu0 0.0
      %1794 = vmatpush1.msra.mxu0 0.0
      %1795 = vmatprep.subr.mxu0 0.0
      %1796 = vmatpush1.msra.mxu0 0.0
      %1797 = vmatprep.subr.mxu0 0.0
      %1798 = vmatpush1.msra.mxu0 0.0
      %1799 = vmatprep.subr.mxu0 0.0
      %1800 = vmatpush1.msra.mxu0 0.0
      %1801 = vmatprep.subr.mxu0 0.0
      %1802 = vmatpush1.msra.mxu0 0.0
      %1803 = vmatprep.subr.mxu0 0.0
      %1804 = vmatpush1.msra.mxu0 0.0
      %1805 = vmatprep.subr.mxu0 0.0
      %1806 = vmatpush1.msra.mxu0 0.0
      %1807 = vmatprep.subr.mxu0 0.0
      %1808 = vmatpush1.msra.mxu0 0.0
      %1809 = vmatprep.subr.mxu0 0.0
      %1810 = vmatpush1.msra.mxu0 0.0
      %1811 = vmatprep.mubr.f32.mxu0 0.0
      %1812 = vmatmul.mubr.f32.gmra.mrb[0].mxu0 %v1648
      %v1813 = vpop.f32.mrb[0].mxu0
      %v1814 = vadd.f32 0.0, %v1813
      %v1815 = vpop.f32.mrb[0].mxu0
      %1816 = vmatprep.mubr.f32.mxu0 0.0
      %1817 = vmatmul.mubr.f32.gmra.mrb[0].mxu0 %v1651
      %v1818 = vpop.f32.mrb[0].mxu0
      %v1819 = vadd.f32 0.0, %v1818
      %v1820 = vpop.f32.mrb[0].mxu0
      %1821 = vmatprep.mubr.f32.mxu0 0.0
      %1822 = vmatmul.mubr.f32.gmra.mrb[0].mxu0 %v1654
      %v1823 = vpop.f32.mrb[0].mxu0
      %v1824 = vadd.f32 0.0, %v1823
      %v1825 = vpop.f32.mrb[0].mxu0
      %1826 = vmatprep.mubr.f32.mxu0 0.0
      %1827 = vmatmul.mubr.f32.gmra.mrb[0].mxu0 %v1657
      %v1828 = vpop.f32.mrb[0].mxu0
      %v1829 = vadd.f32 0.0, %v1828
      %v1830 = vpop.f32.mrb[0].mxu0
      %1831 = vmatprep.mubr.f32.mxu0 0.0
      %1832 = vmatmul.mubr.f32.gmra.mrb[0].mxu0 %v1660
      %v1833 = vpop.f32.mrb[0].mxu0
      %v1834 = vadd.f32 0.0, %v1833
      %v1835 = vpop.f32.mrb[0].mxu0
      %1836 = vmatprep.mubr.f32.mxu0 0.0
      %1837 = vmatmul.mubr.f32.gmra.mrb[0].mxu0 %v1663
      %v1838 = vpop.f32.mrb[0].mxu0
      %v1839 = vadd.f32 0.0, %v1838
      %v1840 = vpop.f32.mrb[0].mxu0
      %1841 = vmatprep.mubr.f32.mxu0 0.0
      %1842 = vmatmul.mubr.f32.gmra.mrb[0].mxu0 %v1666
      %v1843 = vpop.f32.mrb[0].mxu0
      %v1844 = vadd.f32 0.0, %v1843
      %v1845 = vpop.f32.mrb[0].mxu0
      %1846 = vmatprep.mubr.f32.mxu0 0.0
      %1847 = vmatmul.mubr.f32.gmra.mrb[0].mxu0 %v1669
      %v1848 = vpop.f32.mrb[0].mxu0
      %v1849 = vadd.f32 0.0, %v1848
      %v1850 = vpop.f32.mrb[0].mxu0
      %1851 = vmatprep.mubr.f32.mxu0 0.0
      %1852 = vmatmul.mubr.f32.gmra.mrb[0].mxu0 %v1672
      %v1853 = vpop.f32.mrb[0].mxu0
      %v1854 = vadd.f32 0.0, %v1853
      %v1855 = vpop.f32.mrb[0].mxu0
      %1856 = vmatprep.mubr.f32.mxu0 0.0
      %1857 = vmatmul.mubr.f32.gmra.mrb[0].mxu0 %v1675
      %v1858 = vpop.f32.mrb[0].mxu0
      %v1859 = vadd.f32 0.0, %v1858
      %v1860 = vpop.f32.mrb[0].mxu0
      %1861 = vmatprep.mubr.f32.mxu0 0.0
      %1862 = vmatmul.mubr.f32.gmra.mrb[0].mxu0 %v1678
      %v1863 = vpop.f32.mrb[0].mxu0
      %v1864 = vadd.f32 0.0, %v1863
      %v1865 = vpop.f32.mrb[0].mxu0
      %1866 = vmatprep.mubr.f32.mxu0 0.0
      %1867 = vmatmul.mubr.f32.gmra.mrb[0].mxu0 %v1681
      %v1868 = vpop.f32.mrb[0].mxu0
      %v1869 = vadd.f32 0.0, %v1868
      %v1870 = vpop.f32.mrb[0].mxu0
      %1871 = vmatprep.mubr.f32.mxu0 0.0
      %1872 = vmatmul.mubr.f32.gmra.mrb[0].mxu0 %v1684
      %v1873 = vpop.f32.mrb[0].mxu0
      %v1874 = vadd.f32 0.0, %v1873
      %v1875 = vpop.f32.mrb[0].mxu0
      %1876 = vmatprep.mubr.f32.mxu0 0.0
      %1877 = vmatmul.mubr.f32.gmra.mrb[0].mxu0 %v1687
      %v1878 = vpop.f32.mrb[0].mxu0
      %v1879 = vadd.f32 0.0, %v1878
      %v1880 = vpop.f32.mrb[0].mxu0
      %1881 = vmatprep.mubr.f32.mxu0 0.0
      %1882 = vmatmul.mubr.f32.gmra.mrb[0].mxu0 %v1690
      %v1883 = vpop.f32.mrb[0].mxu0
      %v1884 = vadd.f32 0.0, %v1883
      %v1885 = vpop.f32.mrb[0].mxu0
      %1886 = vmatprep.mubr.f32.mxu0 0.0
      %1887 = vmatmul.mubr.f32.gmra.mrb[0].mxu0 %v1693
      %v1888 = vpop.f32.mrb[0].mxu0
      %v1889 = vadd.f32 0.0, %v1888
      %v1890 = vpop.f32.mrb[0].mxu0
      %1891 = vmatprep.mubr.f32.mxu0 0.0
      %1892 = vmatmul.mubr.f32.gmra.mrb[0].mxu0 %v1696
      %v1893 = vpop.f32.mrb[0].mxu0
      %v1894 = vadd.f32 0.0, %v1893
      %v1895 = vpop.f32.mrb[0].mxu0
      %1896 = vmatprep.mubr.f32.mxu0 0.0
      %1897 = vmatmul.mubr.f32.gmra.mrb[0].mxu0 %v1699
      %v1898 = vpop.f32.mrb[0].mxu0
      %v1899 = vadd.f32 0.0, %v1898
      %v1900 = vpop.f32.mrb[0].mxu0
      %1901 = vmatprep.mubr.f32.mxu0 0.0
      %1902 = vmatmul.mubr.f32.gmra.mrb[0].mxu0 %v1702
      %v1903 = vpop.f32.mrb[0].mxu0
      %v1904 = vadd.f32 0.0, %v1903
      %v1905 = vpop.f32.mrb[0].mxu0
      %1906 = vmatprep.mubr.f32.mxu0 0.0
      %1907 = vmatmul.mubr.f32.gmra.mrb[0].mxu0 %v1705
      %v1908 = vpop.f32.mrb[0].mxu0
      %v1909 = vadd.f32 0.0, %v1908
      %v1910 = vpop.f32.mrb[0].mxu0
      %1911 = vmatprep.mubr.f32.mxu0 0.0
      %1912 = vmatmul.mubr.f32.gmra.mrb[0].mxu0 %v1708
      %v1913 = vpop.f32.mrb[0].mxu0
      %v1914 = vadd.f32 0.0, %v1913
      %v1915 = vpop.f32.mrb[0].mxu0
      %1916 = vmatprep.mubr.f32.mxu0 0.0
      %1917 = vmatmul.mubr.f32.gmra.mrb[0].mxu0 %v1711
      %v1918 = vpop.f32.mrb[0].mxu0
      %v1919 = vadd.f32 0.0, %v1918
      %v1920 = vpop.f32.mrb[0].mxu0
      %1921 = vmatprep.mubr.f32.mxu0 0.0
      %1922 = vmatmul.mubr.f32.gmra.mrb[0].mxu0 %v1714
      %v1923 = vpop.f32.mrb[0].mxu0
      %v1924 = vadd.f32 0.0, %v1923
      %v1925 = vpop.f32.mrb[0].mxu0
      %1926 = vmatprep.mubr.f32.mxu0 0.0
      %1927 = vmatmul.mubr.f32.gmra.mrb[0].mxu0 %v1717
      %v1928 = vpop.f32.mrb[0].mxu0
      %v1929 = vadd.f32 0.0, %v1928
      %v1930 = vpop.f32.mrb[0].mxu0
      %1931 = vmatprep.mubr.f32.mxu0 0.0
      %1932 = vmatmul.mubr.f32.gmra.mrb[0].mxu0 %v1720
      %v1933 = vpop.f32.mrb[0].mxu0
      %v1934 = vadd.f32 0.0, %v1933
      %v1935 = vpop.f32.mrb[0].mxu0
      %1936 = vmatprep.mubr.f32.mxu0 0.0
      %1937 = vmatmul.mubr.f32.gmra.mrb[0].mxu0 %v1723
      %v1938 = vpop.f32.mrb[0].mxu0
      %v1939 = vadd.f32 0.0, %v1938
      %v1940 = vpop.f32.mrb[0].mxu0
      %1941 = vmatprep.mubr.f32.mxu0 0.0
      %1942 = vmatmul.mubr.f32.gmra.mrb[0].mxu0 %v1726
      %v1943 = vpop.f32.mrb[0].mxu0
      %v1944 = vadd.f32 0.0, %v1943
      %v1945 = vpop.f32.mrb[0].mxu0
      %1946 = vmatprep.mubr.f32.mxu0 0.0
      %1947 = vmatmul.mubr.f32.gmra.mrb[0].mxu0 %v1729
      %v1948 = vpop.f32.mrb[0].mxu0
      %v1949 = vadd.f32 0.0, %v1948
      %v1950 = vpop.f32.mrb[0].mxu0
      %1951 = vmatprep.mubr.f32.mxu0 0.0
      %1952 = vmatmul.mubr.f32.gmra.mrb[0].mxu0 %v1732
      %v1953 = vpop.f32.mrb[0].mxu0
      %v1954 = vadd.f32 0.0, %v1953
      %v1955 = vpop.f32.mrb[0].mxu0
      %1956 = vmatprep.mubr.f32.mxu0 0.0
      %1957 = vmatmul.mubr.f32.gmra.mrb[0].mxu0 %v1735
      %v1958 = vpop.f32.mrb[0].mxu0
      %v1959 = vadd.f32 0.0, %v1958
      %v1960 = vpop.f32.mrb[0].mxu0
      %1961 = vmatprep.mubr.f32.mxu0 0.0
      %1962 = vmatmul.mubr.f32.gmra.mrb[0].mxu0 %v1738
      %v1963 = vpop.f32.mrb[0].mxu0
      %v1964 = vadd.f32 0.0, %v1963
      %v1965 = vpop.f32.mrb[0].mxu0
      %1966 = vmatprep.mubr.f32.mxu0 0.0
      %1967 = vmatmul.mubr.f32.gmra.mrb[0].mxu0 %v1741
      %v1968 = vpop.f32.mrb[0].mxu0
      %v1969 = vadd.f32 0.0, %v1968
      %v1970 = vpop.f32.mrb[0].mxu0
      %1971 = vdwg.mxu0
      %v1972 = vlaneseq
      %v1973 = vshrl.u32 %v1972, 7
      %v1974 = vsub.s32 0, %v1973
      %v1975 = vrot.slane %v1644, %v1974
      %v1976 = vmul.f32 %v1814, %v1975
      %v1977 = vmul.f32 %v1819, %v1975
      %v1978 = vmul.f32 %v1824, %v1975
      %v1979 = vmul.f32 %v1829, %v1975
      %v1980 = vmul.f32 %v1834, %v1975
      %v1981 = vmul.f32 %v1839, %v1975
      %v1982 = vmul.f32 %v1844, %v1975
      %v1983 = vmul.f32 %v1849, %v1975
      %v1984 = vmul.f32 %v1854, %v1975
      %v1985 = vmul.f32 %v1859, %v1975
      %v1986 = vmul.f32 %v1864, %v1975
      %v1987 = vmul.f32 %v1869, %v1975
      %v1988 = vmul.f32 %v1874, %v1975
      %v1989 = vmul.f32 %v1879, %v1975
      %v1990 = vmul.f32 %v1884, %v1975
      %v1991 = vmul.f32 %v1889, %v1975
      %v1992 = vmul.f32 %v1894, %v1975
      %v1993 = vmul.f32 %v1899, %v1975
      %v1994 = vmul.f32 %v1904, %v1975
      %v1995 = vmul.f32 %v1909, %v1975
      %v1996 = vmul.f32 %v1914, %v1975
      %v1997 = vmul.f32 %v1919, %v1975
      %v1998 = vmul.f32 %v1924, %v1975
      %v1999 = vmul.f32 %v1929, %v1975
      %v2000 = vmul.f32 %v1934, %v1975
      %v2001 = vmul.f32 %v1939, %v1975
      %v2002 = vmul.f32 %v1944, %v1975
      %v2003 = vmul.f32 %v1949, %v1975
      %v2004 = vmul.f32 %v1954, %v1975
      %v2005 = vmul.f32 %v1959, %v1975
      %v2006 = vmul.f32 %v1964, %v1975
      %v2007 = vmul.f32 %v1969, %v1975
      %v2008 = vlaneseq
      %v2009 = vshrl.u32 %v2008, 7
      %v2010 = vsub.s32 1, %v2009
      %v2011 = vrot.slane %v1644, %v2010
      %v2012 = vadd.f32 %v1976, %v2011
      %v2013 = vadd.f32 %v1977, %v2011
      %v2014 = vadd.f32 %v1978, %v2011
      %v2015 = vadd.f32 %v1979, %v2011
      %v2016 = vadd.f32 %v1980, %v2011
      %v2017 = vadd.f32 %v1981, %v2011
      %v2018 = vadd.f32 %v1982, %v2011
      %v2019 = vadd.f32 %v1983, %v2011
      %v2020 = vadd.f32 %v1984, %v2011
      %v2021 = vadd.f32 %v1985, %v2011
      %v2022 = vadd.f32 %v1986, %v2011
      %v2023 = vadd.f32 %v1987, %v2011
      %v2024 = vadd.f32 %v1988, %v2011
      %v2025 = vadd.f32 %v1989, %v2011
      %v2026 = vadd.f32 %v1990, %v2011
      %v2027 = vadd.f32 %v1991, %v2011
      %v2028 = vadd.f32 %v1992, %v2011
      %v2029 = vadd.f32 %v1993, %v2011
      %v2030 = vadd.f32 %v1994, %v2011
      %v2031 = vadd.f32 %v1995, %v2011
      %v2032 = vadd.f32 %v1996, %v2011
      %v2033 = vadd.f32 %v1997, %v2011
      %v2034 = vadd.f32 %v1998, %v2011
      %v2035 = vadd.f32 %v1999, %v2011
      %v2036 = vadd.f32 %v2000, %v2011
      %v2037 = vadd.f32 %v2001, %v2011
      %v2038 = vadd.f32 %v2002, %v2011
      %v2039 = vadd.f32 %v2003, %v2011
      %v2040 = vadd.f32 %v2004, %v2011
      %v2041 = vadd.f32 %v2005, %v2011
      %v2042 = vadd.f32 %v2006, %v2011
      %v2043 = vadd.f32 %v2007, %v2011
      %v2044 = vmax.f32 %v2012, 0.0
      %v2045 = vmax.f32 %v2013, 0.0
      %v2046 = vmax.f32 %v2014, 0.0
      %v2047 = vmax.f32 %v2015, 0.0
      %v2048 = vmax.f32 %v2016, 0.0
      %v2049 = vmax.f32 %v2017, 0.0
      %v2050 = vmax.f32 %v2018, 0.0
      %v2051 = vmax.f32 %v2019, 0.0
      %v2052 = vmax.f32 %v2020, 0.0
      %v2053 = vmax.f32 %v2021, 0.0
      %v2054 = vmax.f32 %v2022, 0.0
      %v2055 = vmax.f32 %v2023, 0.0
      %v2056 = vmax.f32 %v2024, 0.0
      %v2057 = vmax.f32 %v2025, 0.0
      %v2058 = vmax.f32 %v2026, 0.0
      %v2059 = vmax.f32 %v2027, 0.0
      %v2060 = vmax.f32 %v2028, 0.0
      %v2061 = vmax.f32 %v2029, 0.0
      %v2062 = vmax.f32 %v2030, 0.0
      %v2063 = vmax.f32 %v2031, 0.0
      %v2064 = vmax.f32 %v2032, 0.0
      %v2065 = vmax.f32 %v2033, 0.0
      %v2066 = vmax.f32 %v2034, 0.0
      %v2067 = vmax.f32 %v2035, 0.0
      %v2068 = vmax.f32 %v2036, 0.0
      %v2069 = vmax.f32 %v2037, 0.0
      %v2070 = vmax.f32 %v2038, 0.0
      %v2071 = vmax.f32 %v2039, 0.0
      %v2072 = vmax.f32 %v2040, 0.0
      %v2073 = vmax.f32 %v2041, 0.0
      %v2074 = vmax.f32 %v2042, 0.0
      %v2075 = vmax.f32 %v2043, 0.0
      %v2076 = vld [vmem:[%s6] sm:$0x3]
      %v2077 = vld [vmem:[%s293] sm:$0xff]
      %v2078 = vld [vmem:[%s293 + $0x8] sm:$0xff]
      %v2079 = vld [vmem:[%s293 + $0x10] sm:$0xff]
      %v2080 = vld [vmem:[%s293 + $0x18] sm:$0xff]
      %v2081 = vld [vmem:[%s293 + $0x20] sm:$0xff]
      %v2082 = vld [vmem:[%s293 + $0x28] sm:$0xff]
      %v2083 = vld [vmem:[%s293 + $0x30] sm:$0xff]
      %v2084 = vld [vmem:[%s293 + $0x38] sm:$0xff]
      %v2085 = vld [vmem:[%s293 + $0x40] sm:$0xff]
      %v2086 = vld [vmem:[%s293 + $0x48] sm:$0xff]
      %v2087 = vld [vmem:[%s293 + $0x50] sm:$0xff]
      %v2088 = vld [vmem:[%s293 + $0x58] sm:$0xff]
      %v2089 = vld [vmem:[%s293 + $0x60] sm:$0xff]
      %v2090 = vld [vmem:[%s293 + $0x68] sm:$0xff]
      %v2091 = vld [vmem:[%s293 + $0x70] sm:$0xff]
      %v2092 = vld [vmem:[%s293 + $0x78] sm:$0xff]
      %v2093 = vld [vmem:[%s293 + $0x80] sm:$0xff]
      %v2094 = vld [vmem:[%s293 + $0x88] sm:$0xff]
      %v2095 = vld [vmem:[%s293 + $0x90] sm:$0xff]
      %v2096 = vld [vmem:[%s293 + $0x98] sm:$0xff]
      %v2097 = vld [vmem:[%s293 + $0xa0] sm:$0xff]
      %v2098 = vld [vmem:[%s293 + $0xa8] sm:$0xff]
      %v2099 = vld [vmem:[%s293 + $0xb0] sm:$0xff]
      %v2100 = vld [vmem:[%s293 + $0xb8] sm:$0xff]
      %v2101 = vld [vmem:[%s293 + $0xc0] sm:$0xff]
      %v2102 = vld [vmem:[%s293 + $0xc8] sm:$0xff]
      %v2103 = vld [vmem:[%s293 + $0xd0] sm:$0xff]
      %v2104 = vld [vmem:[%s293 + $0xd8] sm:$0xff]
      %v2105 = vld [vmem:[%s293 + $0xe0] sm:$0xff]
      %v2106 = vld [vmem:[%s293 + $0xe8] sm:$0xff]
      %v2107 = vld [vmem:[%s293 + $0xf0] sm:$0xff]
      %v2108 = vld [vmem:[%s293 + $0xf8] sm:$0xff]
      %v2109 = vld [vmem:[%s5] sm:$0xff]
      %v2111 = vsel %vm347, %v2077, 0
      %v2114 = vsel %vm347, %v2078, 0
      %v2117 = vsel %vm347, %v2079, 0
      %v2120 = vsel %vm347, %v2080, 0
      %v2123 = vsel %vm347, %v2081, 0
      %v2126 = vsel %vm347, %v2082, 0
      %v2129 = vsel %vm347, %v2083, 0
      %v2132 = vsel %vm347, %v2084, 0
      %v2135 = vsel %vm347, %v2085, 0
      %v2138 = vsel %vm347, %v2086, 0
      %v2141 = vsel %vm347, %v2087, 0
      %v2144 = vsel %vm347, %v2088, 0
      %v2147 = vsel %vm347, %v2089, 0
      %v2150 = vsel %vm347, %v2090, 0
      %v2153 = vsel %vm347, %v2091, 0
      %v2156 = vsel %vm347, %v2092, 0
      %v2159 = vsel %vm347, %v2093, 0
      %v2162 = vsel %vm347, %v2094, 0
      %v2165 = vsel %vm347, %v2095, 0
      %v2168 = vsel %vm347, %v2096, 0
      %v2171 = vsel %vm347, %v2097, 0
      %v2174 = vsel %vm347, %v2098, 0
      %v2177 = vsel %vm347, %v2099, 0
      %v2180 = vsel %vm347, %v2100, 0
      %v2183 = vsel %vm347, %v2101, 0
      %v2186 = vsel %vm347, %v2102, 0
      %v2189 = vsel %vm347, %v2103, 0
      %v2192 = vsel %vm347, %v2104, 0
      %v2195 = vsel %vm347, %v2105, 0
      %v2198 = vsel %vm347, %v2106, 0
      %v2201 = vsel %vm347, %v2107, 0
      %v2204 = vsel %vm347, %v2108, 0
      %2206 = vmatprep.subr.mxu0 0.0
      %2207 = vmatpush1.msra.mxu0 %v2109
      %2208 = vmatprep.subr.mxu0 0.0
      %2209 = vmatpush1.msra.mxu0 0.0
      %2210 = vmatprep.subr.mxu0 0.0
      %2211 = vmatpush1.msra.mxu0 0.0
      %2212 = vmatprep.subr.mxu0 0.0
      %2213 = vmatpush1.msra.mxu0 0.0
      %2214 = vmatprep.subr.mxu0 0.0
      %2215 = vmatpush1.msra.mxu0 0.0
      %2216 = vmatprep.subr.mxu0 0.0
      %2217 = vmatpush1.msra.mxu0 0.0
      %2218 = vmatprep.subr.mxu0 0.0
      %2219 = vmatpush1.msra.mxu0 0.0
      %2220 = vmatprep.subr.mxu0 0.0
      %2221 = vmatpush1.msra.mxu0 0.0
      %2222 = vmatprep.subr.mxu0 0.0
      %2223 = vmatpush1.msra.mxu0 0.0
      %2224 = vmatprep.subr.mxu0 0.0
      %2225 = vmatpush1.msra.mxu0 0.0
      %2226 = vmatprep.subr.mxu0 0.0
      %2227 = vmatpush1.msra.mxu0 0.0
      %2228 = vmatprep.subr.mxu0 0.0
      %2229 = vmatpush1.msra.mxu0 0.0
      %2230 = vmatprep.subr.mxu0 0.0
      %2231 = vmatpush1.msra.mxu0 0.0
      %2232 = vmatprep.subr.mxu0 0.0
      %2233 = vmatpush1.msra.mxu0 0.0
      %2234 = vmatprep.subr.mxu0 0.0
      %2235 = vmatpush1.msra.mxu0 0.0
      %2236 = vmatprep.subr.mxu0 0.0
      %2237 = vmatpush1.msra.mxu0 0.0
      %2238 = vmatprep.subr.mxu0 0.0
      %2239 = vmatpush1.msra.mxu0 0.0
      %2240 = vmatprep.subr.mxu0 0.0
      %2241 = vmatpush1.msra.mxu0 0.0
      %2242 = vmatprep.subr.mxu0 0.0
      %2243 = vmatpush1.msra.mxu0 0.0
      %2244 = vmatprep.subr.mxu0 0.0
      %2245 = vmatpush1.msra.mxu0 0.0
      %2246 = vmatprep.subr.mxu0 0.0
      %2247 = vmatpush1.msra.mxu0 0.0
      %2248 = vmatprep.subr.mxu0 0.0
      %2249 = vmatpush1.msra.mxu0 0.0
      %2250 = vmatprep.subr.mxu0 0.0
      %2251 = vmatpush1.msra.mxu0 0.0
      %2252 = vmatprep.subr.mxu0 0.0
      %2253 = vmatpush1.msra.mxu0 0.0
      %2254 = vmatprep.subr.mxu0 0.0
      %2255 = vmatpush1.msra.mxu0 0.0
      %2256 = vmatprep.subr.mxu0 0.0
      %2257 = vmatpush1.msra.mxu0 0.0
      %2258 = vmatprep.subr.mxu0 0.0
      %2259 = vmatpush1.msra.mxu0 0.0
      %2260 = vmatprep.subr.mxu0 0.0
      %2261 = vmatpush1.msra.mxu0 0.0
      %2262 = vmatprep.subr.mxu0 0.0
      %2263 = vmatpush1.msra.mxu0 0.0
      %2264 = vmatprep.subr.mxu0 0.0
      %2265 = vmatpush1.msra.mxu0 0.0
      %2266 = vmatprep.subr.mxu0 0.0
      %2267 = vmatpush1.msra.mxu0 0.0
      %2268 = vmatprep.subr.mxu0 0.0
      %2269 = vmatpush1.msra.mxu0 0.0
      %2270 = vmatprep.mubr.f32.mxu0 0.0
      %2271 = vmatmul.mubr.f32.gmra.mrb[0].mxu0 %v2111
      %v2272 = vpop.f32.mrb[0].mxu0
      %v2273 = vadd.f32 0.0, %v2272
      %v2274 = vpop.f32.mrb[0].mxu0
      %2275 = vmatprep.mubr.f32.mxu0 0.0
      %2276 = vmatmul.mubr.f32.gmra.mrb[0].mxu0 %v2114
      %v2277 = vpop.f32.mrb[0].mxu0
      %v2278 = vadd.f32 0.0, %v2277
      %v2279 = vpop.f32.mrb[0].mxu0
      %2280 = vmatprep.mubr.f32.mxu0 0.0
      %2281 = vmatmul.mubr.f32.gmra.mrb[0].mxu0 %v2117
      %v2282 = vpop.f32.mrb[0].mxu0
      %v2283 = vadd.f32 0.0, %v2282
      %v2284 = vpop.f32.mrb[0].mxu0
      %2285 = vmatprep.mubr.f32.mxu0 0.0
      %2286 = vmatmul.mubr.f32.gmra.mrb[0].mxu0 %v2120
      %v2287 = vpop.f32.mrb[0].mxu0
      %v2288 = vadd.f32 0.0, %v2287
      %v2289 = vpop.f32.mrb[0].mxu0
      %2290 = vmatprep.mubr.f32.mxu0 0.0
      %2291 = vmatmul.mubr.f32.gmra.mrb[0].mxu0 %v2123
      %v2292 = vpop.f32.mrb[0].mxu0
      %v2293 = vadd.f32 0.0, %v2292
      %v2294 = vpop.f32.mrb[0].mxu0
      %2295 = vmatprep.mubr.f32.mxu0 0.0
      %2296 = vmatmul.mubr.f32.gmra.mrb[0].mxu0 %v2126
      %v2297 = vpop.f32.mrb[0].mxu0
      %v2298 = vadd.f32 0.0, %v2297
      %v2299 = vpop.f32.mrb[0].mxu0
      %2300 = vmatprep.mubr.f32.mxu0 0.0
      %2301 = vmatmul.mubr.f32.gmra.mrb[0].mxu0 %v2129
      %v2302 = vpop.f32.mrb[0].mxu0
      %v2303 = vadd.f32 0.0, %v2302
      %v2304 = vpop.f32.mrb[0].mxu0
      %2305 = vmatprep.mubr.f32.mxu0 0.0
      %2306 = vmatmul.mubr.f32.gmra.mrb[0].mxu0 %v2132
      %v2307 = vpop.f32.mrb[0].mxu0
      %v2308 = vadd.f32 0.0, %v2307
      %v2309 = vpop.f32.mrb[0].mxu0
      %2310 = vmatprep.mubr.f32.mxu0 0.0
      %2311 = vmatmul.mubr.f32.gmra.mrb[0].mxu0 %v2135
      %v2312 = vpop.f32.mrb[0].mxu0
      %v2313 = vadd.f32 0.0, %v2312
      %v2314 = vpop.f32.mrb[0].mxu0
      %2315 = vmatprep.mubr.f32.mxu0 0.0
      %2316 = vmatmul.mubr.f32.gmra.mrb[0].mxu0 %v2138
      %v2317 = vpop.f32.mrb[0].mxu0
      %v2318 = vadd.f32 0.0, %v2317
      %v2319 = vpop.f32.mrb[0].mxu0
      %2320 = vmatprep.mubr.f32.mxu0 0.0
      %2321 = vmatmul.mubr.f32.gmra.mrb[0].mxu0 %v2141
      %v2322 = vpop.f32.mrb[0].mxu0
      %v2323 = vadd.f32 0.0, %v2322
      %v2324 = vpop.f32.mrb[0].mxu0
      %2325 = vmatprep.mubr.f32.mxu0 0.0
      %2326 = vmatmul.mubr.f32.gmra.mrb[0].mxu0 %v2144
      %v2327 = vpop.f32.mrb[0].mxu0
      %v2328 = vadd.f32 0.0, %v2327
      %v2329 = vpop.f32.mrb[0].mxu0
      %2330 = vmatprep.mubr.f32.mxu0 0.0
      %2331 = vmatmul.mubr.f32.gmra.mrb[0].mxu0 %v2147
      %v2332 = vpop.f32.mrb[0].mxu0
      %v2333 = vadd.f32 0.0, %v2332
      %v2334 = vpop.f32.mrb[0].mxu0
      %2335 = vmatprep.mubr.f32.mxu0 0.0
      %2336 = vmatmul.mubr.f32.gmra.mrb[0].mxu0 %v2150
      %v2337 = vpop.f32.mrb[0].mxu0
      %v2338 = vadd.f32 0.0, %v2337
      %v2339 = vpop.f32.mrb[0].mxu0
      %2340 = vmatprep.mubr.f32.mxu0 0.0
      %2341 = vmatmul.mubr.f32.gmra.mrb[0].mxu0 %v2153
      %v2342 = vpop.f32.mrb[0].mxu0
      %v2343 = vadd.f32 0.0, %v2342
      %v2344 = vpop.f32.mrb[0].mxu0
      %2345 = vmatprep.mubr.f32.mxu0 0.0
      %2346 = vmatmul.mubr.f32.gmra.mrb[0].mxu0 %v2156
      %v2347 = vpop.f32.mrb[0].mxu0
      %v2348 = vadd.f32 0.0, %v2347
      %v2349 = vpop.f32.mrb[0].mxu0
      %2350 = vmatprep.mubr.f32.mxu0 0.0
      %2351 = vmatmul.mubr.f32.gmra.mrb[0].mxu0 %v2159
      %v2352 = vpop.f32.mrb[0].mxu0
      %v2353 = vadd.f32 0.0, %v2352
      %v2354 = vpop.f32.mrb[0].mxu0
      %2355 = vmatprep.mubr.f32.mxu0 0.0
      %2356 = vmatmul.mubr.f32.gmra.mrb[0].mxu0 %v2162
      %v2357 = vpop.f32.mrb[0].mxu0
      %v2358 = vadd.f32 0.0, %v2357
      %v2359 = vpop.f32.mrb[0].mxu0
      %2360 = vmatprep.mubr.f32.mxu0 0.0
      %2361 = vmatmul.mubr.f32.gmra.mrb[0].mxu0 %v2165
      %v2362 = vpop.f32.mrb[0].mxu0
      %v2363 = vadd.f32 0.0, %v2362
      %v2364 = vpop.f32.mrb[0].mxu0
      %2365 = vmatprep.mubr.f32.mxu0 0.0
      %2366 = vmatmul.mubr.f32.gmra.mrb[0].mxu0 %v2168
      %v2367 = vpop.f32.mrb[0].mxu0
      %v2368 = vadd.f32 0.0, %v2367
      %v2369 = vpop.f32.mrb[0].mxu0
      %2370 = vmatprep.mubr.f32.mxu0 0.0
      %2371 = vmatmul.mubr.f32.gmra.mrb[0].mxu0 %v2171
      %v2372 = vpop.f32.mrb[0].mxu0
      %v2373 = vadd.f32 0.0, %v2372
      %v2374 = vpop.f32.mrb[0].mxu0
      %2375 = vmatprep.mubr.f32.mxu0 0.0
      %2376 = vmatmul.mubr.f32.gmra.mrb[0].mxu0 %v2174
      %v2377 = vpop.f32.mrb[0].mxu0
      %v2378 = vadd.f32 0.0, %v2377
      %v2379 = vpop.f32.mrb[0].mxu0
      %2380 = vmatprep.mubr.f32.mxu0 0.0
      %2381 = vmatmul.mubr.f32.gmra.mrb[0].mxu0 %v2177
      %v2382 = vpop.f32.mrb[0].mxu0
      %v2383 = vadd.f32 0.0, %v2382
      %v2384 = vpop.f32.mrb[0].mxu0
      %2385 = vmatprep.mubr.f32.mxu0 0.0
      %2386 = vmatmul.mubr.f32.gmra.mrb[0].mxu0 %v2180
      %v2387 = vpop.f32.mrb[0].mxu0
      %v2388 = vadd.f32 0.0, %v2387
      %v2389 = vpop.f32.mrb[0].mxu0
      %2390 = vmatprep.mubr.f32.mxu0 0.0
      %2391 = vmatmul.mubr.f32.gmra.mrb[0].mxu0 %v2183
      %v2392 = vpop.f32.mrb[0].mxu0
      %v2393 = vadd.f32 0.0, %v2392
      %v2394 = vpop.f32.mrb[0].mxu0
      %2395 = vmatprep.mubr.f32.mxu0 0.0
      %2396 = vmatmul.mubr.f32.gmra.mrb[0].mxu0 %v2186
      %v2397 = vpop.f32.mrb[0].mxu0
      %v2398 = vadd.f32 0.0, %v2397
      %v2399 = vpop.f32.mrb[0].mxu0
      %2400 = vmatprep.mubr.f32.mxu0 0.0
      %2401 = vmatmul.mubr.f32.gmra.mrb[0].mxu0 %v2189
      %v2402 = vpop.f32.mrb[0].mxu0
      %v2403 = vadd.f32 0.0, %v2402
      %v2404 = vpop.f32.mrb[0].mxu0
      %2405 = vmatprep.mubr.f32.mxu0 0.0
      %2406 = vmatmul.mubr.f32.gmra.mrb[0].mxu0 %v2192
      %v2407 = vpop.f32.mrb[0].mxu0
      %v2408 = vadd.f32 0.0, %v2407
      %v2409 = vpop.f32.mrb[0].mxu0
      %2410 = vmatprep.mubr.f32.mxu0 0.0
      %2411 = vmatmul.mubr.f32.gmra.mrb[0].mxu0 %v2195
      %v2412 = vpop.f32.mrb[0].mxu0
      %v2413 = vadd.f32 0.0, %v2412
      %v2414 = vpop.f32.mrb[0].mxu0
      %2415 = vmatprep.mubr.f32.mxu0 0.0
      %2416 = vmatmul.mubr.f32.gmra.mrb[0].mxu0 %v2198
      %v2417 = vpop.f32.mrb[0].mxu0
      %v2418 = vadd.f32 0.0, %v2417
      %v2419 = vpop.f32.mrb[0].mxu0
      %2420 = vmatprep.mubr.f32.mxu0 0.0
      %2421 = vmatmul.mubr.f32.gmra.mrb[0].mxu0 %v2201
      %v2422 = vpop.f32.mrb[0].mxu0
      %v2423 = vadd.f32 0.0, %v2422
      %v2424 = vpop.f32.mrb[0].mxu0
      %2425 = vmatprep.mubr.f32.mxu0 0.0
      %2426 = vmatmul.mubr.f32.gmra.mrb[0].mxu0 %v2204
      %v2427 = vpop.f32.mrb[0].mxu0
      %v2428 = vadd.f32 0.0, %v2427
      %v2429 = vpop.f32.mrb[0].mxu0
      %2430 = vdwg.mxu0
      %v2431 = vlaneseq
      %v2432 = vshrl.u32 %v2431, 7
      %v2433 = vsub.s32 0, %v2432
      %v2434 = vrot.slane %v2076, %v2433
      %v2435 = vmul.f32 %v2273, %v2434
      %v2436 = vmul.f32 %v2278, %v2434
      %v2437 = vmul.f32 %v2283, %v2434
      %v2438 = vmul.f32 %v2288, %v2434
      %v2439 = vmul.f32 %v2293, %v2434
      %v2440 = vmul.f32 %v2298, %v2434
      %v2441 = vmul.f32 %v2303, %v2434
      %v2442 = vmul.f32 %v2308, %v2434
      %v2443 = vmul.f32 %v2313, %v2434
      %v2444 = vmul.f32 %v2318, %v2434
      %v2445 = vmul.f32 %v2323, %v2434
      %v2446 = vmul.f32 %v2328, %v2434
      %v2447 = vmul.f32 %v2333, %v2434
      %v2448 = vmul.f32 %v2338, %v2434
      %v2449 = vmul.f32 %v2343, %v2434
      %v2450 = vmul.f32 %v2348, %v2434
      %v2451 = vmul.f32 %v2353, %v2434
      %v2452 = vmul.f32 %v2358, %v2434
      %v2453 = vmul.f32 %v2363, %v2434
      %v2454 = vmul.f32 %v2368, %v2434
      %v2455 = vmul.f32 %v2373, %v2434
      %v2456 = vmul.f32 %v2378, %v2434
      %v2457 = vmul.f32 %v2383, %v2434
      %v2458 = vmul.f32 %v2388, %v2434
      %v2459 = vmul.f32 %v2393, %v2434
      %v2460 = vmul.f32 %v2398, %v2434
      %v2461 = vmul.f32 %v2403, %v2434
      %v2462 = vmul.f32 %v2408, %v2434
      %v2463 = vmul.f32 %v2413, %v2434
      %v2464 = vmul.f32 %v2418, %v2434
      %v2465 = vmul.f32 %v2423, %v2434
      %v2466 = vmul.f32 %v2428, %v2434
      %v2467 = vlaneseq
      %v2468 = vshrl.u32 %v2467, 7
      %v2469 = vsub.s32 1, %v2468
      %v2470 = vrot.slane %v2076, %v2469
      %v2471 = vadd.f32 %v2435, %v2470
      %v2472 = vadd.f32 %v2436, %v2470
      %v2473 = vadd.f32 %v2437, %v2470
      %v2474 = vadd.f32 %v2438, %v2470
      %v2475 = vadd.f32 %v2439, %v2470
      %v2476 = vadd.f32 %v2440, %v2470
      %v2477 = vadd.f32 %v2441, %v2470
      %v2478 = vadd.f32 %v2442, %v2470
      %v2479 = vadd.f32 %v2443, %v2470
      %v2480 = vadd.f32 %v2444, %v2470
      %v2481 = vadd.f32 %v2445, %v2470
      %v2482 = vadd.f32 %v2446, %v2470
      %v2483 = vadd.f32 %v2447, %v2470
      %v2484 = vadd.f32 %v2448, %v2470
      %v2485 = vadd.f32 %v2449, %v2470
      %v2486 = vadd.f32 %v2450, %v2470
      %v2487 = vadd.f32 %v2451, %v2470
      %v2488 = vadd.f32 %v2452, %v2470
      %v2489 = vadd.f32 %v2453, %v2470
      %v2490 = vadd.f32 %v2454, %v2470
      %v2491 = vadd.f32 %v2455, %v2470
      %v2492 = vadd.f32 %v2456, %v2470
      %v2493 = vadd.f32 %v2457, %v2470
      %v2494 = vadd.f32 %v2458, %v2470
      %v2495 = vadd.f32 %v2459, %v2470
      %v2496 = vadd.f32 %v2460, %v2470
      %v2497 = vadd.f32 %v2461, %v2470
      %v2498 = vadd.f32 %v2462, %v2470
      %v2499 = vadd.f32 %v2463, %v2470
      %v2500 = vadd.f32 %v2464, %v2470
      %v2501 = vadd.f32 %v2465, %v2470
      %v2502 = vadd.f32 %v2466, %v2470
      %v2503 = vmax.f32 %v2471, 0.0
      %v2504 = vmax.f32 %v2472, 0.0
      %v2505 = vmax.f32 %v2473, 0.0
      %v2506 = vmax.f32 %v2474, 0.0
      %v2507 = vmax.f32 %v2475, 0.0
      %v2508 = vmax.f32 %v2476, 0.0
      %v2509 = vmax.f32 %v2477, 0.0
      %v2510 = vmax.f32 %v2478, 0.0
      %v2511 = vmax.f32 %v2479, 0.0
      %v2512 = vmax.f32 %v2480, 0.0
      %v2513 = vmax.f32 %v2481, 0.0
      %v2514 = vmax.f32 %v2482, 0.0
      %v2515 = vmax.f32 %v2483, 0.0
      %v2516 = vmax.f32 %v2484, 0.0
      %v2517 = vmax.f32 %v2485, 0.0
      %v2518 = vmax.f32 %v2486, 0.0
      %v2519 = vmax.f32 %v2487, 0.0
      %v2520 = vmax.f32 %v2488, 0.0
      %v2521 = vmax.f32 %v2489, 0.0
      %v2522 = vmax.f32 %v2490, 0.0
      %v2523 = vmax.f32 %v2491, 0.0
      %v2524 = vmax.f32 %v2492, 0.0
      %v2525 = vmax.f32 %v2493, 0.0
      %v2526 = vmax.f32 %v2494, 0.0
      %v2527 = vmax.f32 %v2495, 0.0
      %v2528 = vmax.f32 %v2496, 0.0
      %v2529 = vmax.f32 %v2497, 0.0
      %v2530 = vmax.f32 %v2498, 0.0
      %v2531 = vmax.f32 %v2499, 0.0
      %v2532 = vmax.f32 %v2500, 0.0
      %v2533 = vmax.f32 %v2501, 0.0
      %v2534 = vmax.f32 %v2502, 0.0
      %2535 = vst.msk [vmem:[%s298] sm:$0xff] %vm347, %v2044
      %2536 = vst.msk [vmem:[%s298 + $0x8] sm:$0xff] %vm347, %v2045
      %2537 = vst.msk [vmem:[%s298 + $0x10] sm:$0xff] %vm347, %v2046
      %2538 = vst.msk [vmem:[%s298 + $0x18] sm:$0xff] %vm347, %v2047
      %2539 = vst.msk [vmem:[%s298 + $0x20] sm:$0xff] %vm347, %v2048
      %2540 = vst.msk [vmem:[%s298 + $0x28] sm:$0xff] %vm347, %v2049
      %2541 = vst.msk [vmem:[%s298 + $0x30] sm:$0xff] %vm347, %v2050
      %2542 = vst.msk [vmem:[%s298 + $0x38] sm:$0xff] %vm347, %v2051
      %2543 = vst.msk [vmem:[%s298 + $0x40] sm:$0xff] %vm347, %v2052
      %2544 = vst.msk [vmem:[%s298 + $0x48] sm:$0xff] %vm347, %v2053
      %2545 = vst.msk [vmem:[%s298 + $0x50] sm:$0xff] %vm347, %v2054
      %2546 = vst.msk [vmem:[%s298 + $0x58] sm:$0xff] %vm347, %v2055
      %2547 = vst.msk [vmem:[%s298 + $0x60] sm:$0xff] %vm347, %v2056
      %2548 = vst.msk [vmem:[%s298 + $0x68] sm:$0xff] %vm347, %v2057
      %2549 = vst.msk [vmem:[%s298 + $0x70] sm:$0xff] %vm347, %v2058
      %2550 = vst.msk [vmem:[%s298 + $0x78] sm:$0xff] %vm347, %v2059
      %2551 = vst.msk [vmem:[%s298 + $0x80] sm:$0xff] %vm347, %v2060
      %2552 = vst.msk [vmem:[%s298 + $0x88] sm:$0xff] %vm347, %v2061
      %2553 = vst.msk [vmem:[%s298 + $0x90] sm:$0xff] %vm347, %v2062
      %2554 = vst.msk [vmem:[%s298 + $0x98] sm:$0xff] %vm347, %v2063
      %2555 = vst.msk [vmem:[%s298 + $0xa0] sm:$0xff] %vm347, %v2064
      %2556 = vst.msk [vmem:[%s298 + $0xa8] sm:$0xff] %vm347, %v2065
      %2557 = vst.msk [vmem:[%s298 + $0xb0] sm:$0xff] %vm347, %v2066
      %2558 = vst.msk [vmem:[%s298 + $0xb8] sm:$0xff] %vm347, %v2067
      %2559 = vst.msk [vmem:[%s298 + $0xc0] sm:$0xff] %vm347, %v2068
      %2560 = vst.msk [vmem:[%s298 + $0xc8] sm:$0xff] %vm347, %v2069
      %2561 = vst.msk [vmem:[%s298 + $0xd0] sm:$0xff] %vm347, %v2070
      %2562 = vst.msk [vmem:[%s298 + $0xd8] sm:$0xff] %vm347, %v2071
      %2563 = vst.msk [vmem:[%s298 + $0xe0] sm:$0xff] %vm347, %v2072
      %2564 = vst.msk [vmem:[%s298 + $0xe8] sm:$0xff] %vm347, %v2073
      %2565 = vst.msk [vmem:[%s298 + $0xf0] sm:$0xff] %vm347, %v2074
      %2566 = vst.msk [vmem:[%s298 + $0xf8] sm:$0xff] %vm347, %v2075
      %2599 = vrot.lane.b32.xlu0 %v2503, 8
      %v2600 = vpop.permute.xlu0 %2599
      %2601 = vrot.lane.b32.xlu0 %v2504, 8
      %v2602 = vpop.permute.xlu0 %2601
      %2603 = vrot.lane.b32.xlu0 %v2505, 8
      %v2604 = vpop.permute.xlu0 %2603
      %2605 = vrot.lane.b32.xlu0 %v2506, 8
      %v2606 = vpop.permute.xlu0 %2605
      %2607 = vrot.lane.b32.xlu0 %v2507, 8
      %v2608 = vpop.permute.xlu0 %2607
      %2609 = vrot.lane.b32.xlu0 %v2508, 8
      %v2610 = vpop.permute.xlu0 %2609
      %2611 = vrot.lane.b32.xlu0 %v2509, 8
      %v2612 = vpop.permute.xlu0 %2611
      %2613 = vrot.lane.b32.xlu0 %v2510, 8
      %v2614 = vpop.permute.xlu0 %2613
      %2615 = vrot.lane.b32.xlu0 %v2511, 8
      %v2616 = vpop.permute.xlu0 %2615
      %2617 = vrot.lane.b32.xlu0 %v2512, 8
      %v2618 = vpop.permute.xlu0 %2617
      %2619 = vrot.lane.b32.xlu0 %v2513, 8
      %v2620 = vpop.permute.xlu0 %2619
      %2621 = vrot.lane.b32.xlu0 %v2514, 8
      %v2622 = vpop.permute.xlu0 %2621
      %2623 = vrot.lane.b32.xlu0 %v2515, 8
      %v2624 = vpop.permute.xlu0 %2623
      %2625 = vrot.lane.b32.xlu0 %v2516, 8
      %v2626 = vpop.permute.xlu0 %2625
      %2627 = vrot.lane.b32.xlu0 %v2517, 8
      %v2628 = vpop.permute.xlu0 %2627
      %2629 = vrot.lane.b32.xlu0 %v2518, 8
      %v2630 = vpop.permute.xlu0 %2629
      %2631 = vrot.lane.b32.xlu0 %v2519, 8
      %v2632 = vpop.permute.xlu0 %2631
      %2633 = vrot.lane.b32.xlu0 %v2520, 8
      %v2634 = vpop.permute.xlu0 %2633
      %2635 = vrot.lane.b32.xlu0 %v2521, 8
      %v2636 = vpop.permute.xlu0 %2635
      %2637 = vrot.lane.b32.xlu0 %v2522, 8
      %v2638 = vpop.permute.xlu0 %2637
      %2639 = vrot.lane.b32.xlu0 %v2523, 8
      %v2640 = vpop.permute.xlu0 %2639
      %2641 = vrot.lane.b32.xlu0 %v2524, 8
      %v2642 = vpop.permute.xlu0 %2641
      %2643 = vrot.lane.b32.xlu0 %v2525, 8
      %v2644 = vpop.permute.xlu0 %2643
      %2645 = vrot.lane.b32.xlu0 %v2526, 8
      %v2646 = vpop.permute.xlu0 %2645
      %2647 = vrot.lane.b32.xlu0 %v2527, 8
      %v2648 = vpop.permute.xlu0 %2647
      %2649 = vrot.lane.b32.xlu0 %v2528, 8
      %v2650 = vpop.permute.xlu0 %2649
      %2651 = vrot.lane.b32.xlu0 %v2529, 8
      %v2652 = vpop.permute.xlu0 %2651
      %2653 = vrot.lane.b32.xlu0 %v2530, 8
      %v2654 = vpop.permute.xlu0 %2653
      %2655 = vrot.lane.b32.xlu0 %v2531, 8
      %v2656 = vpop.permute.xlu0 %2655
      %2657 = vrot.lane.b32.xlu0 %v2532, 8
      %v2658 = vpop.permute.xlu0 %2657
      %2659 = vrot.lane.b32.xlu0 %v2533, 8
      %v2660 = vpop.permute.xlu0 %2659
      %2661 = vrot.lane.b32.xlu0 %v2534, 8
      %v2662 = vpop.permute.xlu0 %2661
      %vm2695 = vcmask 130112
      %2696 = vst.msk [vmem:[%s298] sm:$0xff] %vm2695, %v2600
      %2697 = vst.msk [vmem:[%s298 + $0x8] sm:$0xff] %vm2695, %v2602
      %2698 = vst.msk [vmem:[%s298 + $0x10] sm:$0xff] %vm2695, %v2604
      %2699 = vst.msk [vmem:[%s298 + $0x18] sm:$0xff] %vm2695, %v2606
      %2700 = vst.msk [vmem:[%s298 + $0x20] sm:$0xff] %vm2695, %v2608
      %2701 = vst.msk [vmem:[%s298 + $0x28] sm:$0xff] %vm2695, %v2610
      %2702 = vst.msk [vmem:[%s298 + $0x30] sm:$0xff] %vm2695, %v2612
      %2703 = vst.msk [vmem:[%s298 + $0x38] sm:$0xff] %vm2695, %v2614
      %2704 = vst.msk [vmem:[%s298 + $0x40] sm:$0xff] %vm2695, %v2616
      %2705 = vst.msk [vmem:[%s298 + $0x48] sm:$0xff] %vm2695, %v2618
      %2706 = vst.msk [vmem:[%s298 + $0x50] sm:$0xff] %vm2695, %v2620
      %2707 = vst.msk [vmem:[%s298 + $0x58] sm:$0xff] %vm2695, %v2622
      %2708 = vst.msk [vmem:[%s298 + $0x60] sm:$0xff] %vm2695, %v2624
      %2709 = vst.msk [vmem:[%s298 + $0x68] sm:$0xff] %vm2695, %v2626
      %2710 = vst.msk [vmem:[%s298 + $0x70] sm:$0xff] %vm2695, %v2628
      %2711 = vst.msk [vmem:[%s298 + $0x78] sm:$0xff] %vm2695, %v2630
      %2712 = vst.msk [vmem:[%s298 + $0x80] sm:$0xff] %vm2695, %v2632
      %2713 = vst.msk [vmem:[%s298 + $0x88] sm:$0xff] %vm2695, %v2634
      %2714 = vst.msk [vmem:[%s298 + $0x90] sm:$0xff] %vm2695, %v2636
      %2715 = vst.msk [vmem:[%s298 + $0x98] sm:$0xff] %vm2695, %v2638
      %2716 = vst.msk [vmem:[%s298 + $0xa0] sm:$0xff] %vm2695, %v2640
      %2717 = vst.msk [vmem:[%s298 + $0xa8] sm:$0xff] %vm2695, %v2642
      %2718 = vst.msk [vmem:[%s298 + $0xb0] sm:$0xff] %vm2695, %v2644
      %2719 = vst.msk [vmem:[%s298 + $0xb8] sm:$0xff] %vm2695, %v2646
      %2720 = vst.msk [vmem:[%s298 + $0xc0] sm:$0xff] %vm2695, %v2648
      %2721 = vst.msk [vmem:[%s298 + $0xc8] sm:$0xff] %vm2695, %v2650
      %2722 = vst.msk [vmem:[%s298 + $0xd0] sm:$0xff] %vm2695, %v2652
      %2723 = vst.msk [vmem:[%s298 + $0xd8] sm:$0xff] %vm2695, %v2654
      %2724 = vst.msk [vmem:[%s298 + $0xe0] sm:$0xff] %vm2695, %v2656
      %2725 = vst.msk [vmem:[%s298 + $0xe8] sm:$0xff] %vm2695, %v2658
      %2726 = vst.msk [vmem:[%s298 + $0xf0] sm:$0xff] %vm2695, %v2660
      %2727 = vst.msk [vmem:[%s298 + $0xf8] sm:$0xff] %vm2695, %v2662
      %p2728 = scmp.lt.s32.totalorder %s18, 1
      %s2729 = scalar_select %p2728, %s18, 1
      %s2730 = smul.addr %s2729, 32
      %s2731 = smul.addr %s2730, 8
      %s2732 = scalar_lea.vmem %s7, %s2731
      // Predicated region
      $region49: #{tpu_custom_call.1} parent=47 // pred_check
        %p2733 = pneg %p193
      $region50: #{tpu_custom_call.1} parent=47 // pred_check_branch
        %2735 = sbr.rel (%p2733) target = $region52
      $region51: #{tpu_custom_call.1} parent=47 // pred_region
        _
      $region52: #{tpu_custom_call.1} parent=47 // pred_fallthru
        _
    $region48: #{tpu_custom_call.1} parent=5 // pred_fallthru
      _
    %p2736 = scmp.le.s32.totalorder 2, %s13
    // Predicated region
    $region53: #{tpu_custom_call.1} parent=5 // pred_check
      %p2737 = pneg %p2736
    $region54: #{tpu_custom_call.1} parent=5 // pred_check_branch
      %2739 = sbr.rel (%p2737) target = $region56
    $region55: #{tpu_custom_call.1} parent=5 // pred_region
      %s2740 = ssub.s32 %s13, 2
      // Predicated region
      $region57: #{tpu_custom_call.1} parent=55 // pred_check
        %p2741 = pneg %p199
      $region58: #{tpu_custom_call.1} parent=55 // pred_check_branch
        %2743 = sbr.rel (%p2741) target = $region60
      $region59: #{tpu_custom_call.1} parent=55 // pred_region
        %p2744 = scmp.lt.s32.totalorder %s19, 1
        %s2745 = scalar_select %p2744, %s19, 1
        %s2746 = smul.addr %s2745, 32
        %s2747 = smul.addr %s2746, 8
        %s2748 = scalar_lea.vmem %s7, %s2747
      $region60: #{tpu_custom_call.1} parent=55 // pred_fallthru
        _
    $region56: #{tpu_custom_call.1} parent=5 // pred_fallthru
      _
  $region6: #{tpu_custom_call.1} parent=0 // loop_footer
    %s17 = sadd.s32 1, %s13
  $region7: #{tpu_custom_call.1} parent=0 // loop_footer_branch
    %12 = sbr.rel target = $region3
  $region8: #{tpu_custom_call.1} parent=0 // loop_exit
    _

</llo_original>
